<compile_context>
chip_gen: v6e
topology: v6e:2x2x1
jax: 0.10.0
libtpu: 0.0.40
codegen_flags: <defaults>
</compile_context>

<pallas_src>
import functools

import numpy as np
import jax
import jax.numpy as jnp
from jax import lax
from jax.experimental import pallas as pl
from jax.experimental.pallas import tpu as pltpu


# ------------------------- fused Pallas kernel -------------------------

def _csa_rp_kernel(x_ref, se1, te1, be1, se2, te2, be2, wfc, bfc,
                   sd1, td1, bd1, sd2, td2, bd2, cent_ref,
                   recon_ref, emb_ref, q_ref, dcr):
    f32, bf16 = jnp.float32, jnp.bfloat16

    def conv(a, s_ref, t_ref, b_ref, act):
        # Y = sum_ki S_ki @ A @ T_ki + bias   (bf16 MXU operands, f32 accumulate)
        ro = s_ref.shape[0] // 3            # batch * out_h
        kc = t_ref.shape[0] // 3            # in_w * in_c
        a = a.astype(bf16)
        acc = None
        for ki in range(3):
            s_ki = s_ref[ki * ro:(ki + 1) * ro, :]
            t_ki = t_ref[ki * kc:(ki + 1) * kc, :]
            # S rows are one-hot (or zero) -> the gather result is exactly A's
            # bf16 rows, so the bf16 round-trip is lossless.
            g = jnp.dot(s_ki, a, preferred_element_type=f32).astype(bf16)
            term = jnp.dot(g, t_ki, preferred_element_type=f32)
            acc = term if acc is None else acc + term
        acc = acc + b_ref[...]
        if act == "relu":
            return jnp.maximum(acc, 0.0)
        if act == "sigmoid":
            return jax.nn.sigmoid(acc)
        return acc

    batch, emb_dim = emb_ref.shape
    n_clusters = q_ref.shape[1]

    # ---------------- encoder ----------------
    h1 = conv(x_ref[...], se1, te1, be1, "relu")          # [batch*H/2, (W/2)*16]
    h2 = conv(h1, se2, te2, be2, "relu")                  # [batch*h4, w4*emb]

    # global average pool -> embedding
    h4 = h2.shape[0] // batch
    w4 = h2.shape[1] // emb_dim
    inv = 1.0 / float(h4 * w4)
    for bi in range(batch):
        rows = jnp.sum(h2[bi * h4:(bi + 1) * h4, :], axis=0, keepdims=True)
        e = rows[:, 0:emb_dim]
        for wi in range(1, w4):
            e = e + rows[:, wi * emb_dim:(wi + 1) * emb_dim]
        emb_ref[bi:bi + 1, :] = e * inv
    emb = emb_ref[...]                                    # [batch, emb] f32

    # ---------------- decoder ----------------
    d = jnp.dot(emb.astype(bf16), wfc[...], preferred_element_type=f32) + bfc[...]
    d = jnp.maximum(d, 0.0)                               # [batch, h4*w4*emb]
    chunk = dcr.shape[1]                                  # w4*emb
    hh = dcr.shape[0] // batch                            # h4
    for bi in range(batch):
        for hi in range(hh):
            dcr[bi * hh + hi:bi * hh + hi + 1, :] = (
                d[bi:bi + 1, hi * chunk:(hi + 1) * chunk])

    h3 = conv(dcr[...], sd1, td1, bd1, "relu")            # [batch*H/2, (W/2)*16]
    recon_ref[...] = conv(h3, sd2, td2, bd2, "sigmoid")   # [batch*H, W*C]

    # ---------------- PCC (Student-t, alpha = 1), VPU only ----------------
    cent = cent_ref[...]
    for k in range(n_clusters):
        diff = emb - cent[k:k + 1, :]
        d2 = jnp.sum(diff * diff, axis=1, keepdims=True)  # [batch, 1]
        q_ref[:, k:k + 1] = 1.0 / (1.0 + d2)
    qv = q_ref[...]
    q_ref[...] = qv / jnp.sum(qv, axis=1, keepdims=True)


def _fused_forward(prepped, x2d, batch):
    cent = prepped["centroid"]
    emb_dim, n_clusters = cent.shape[1], cent.shape[0]
    vspec = pl.BlockSpec(memory_space=pltpu.MemorySpace.VMEM)
    dcr_shape = (prepped["dec1_S"].shape[1], prepped["dec1_T"].shape[0] // 3)
    out_shape = (
        jax.ShapeDtypeStruct(x2d.shape, jnp.float32),            # recon2d
        jax.ShapeDtypeStruct((batch, emb_dim), jnp.float32),     # emb
        jax.ShapeDtypeStruct((batch, n_clusters), jnp.float32),  # q
    )
    return pl.pallas_call(
        _csa_rp_kernel,
        out_shape=out_shape,
        in_specs=[vspec] * 16,
        out_specs=(vspec, vspec, vspec),
        scratch_shapes=[pltpu.VMEM(dcr_shape, jnp.float32)],
    )(x2d,
      prepped["enc1_S"], prepped["enc1_T"], prepped["enc1_b"],
      prepped["enc2_S"], prepped["enc2_T"], prepped["enc2_b"],
      prepped["fc_w"], prepped["fc_b"],
      prepped["dec1_S"], prepped["dec1_T"], prepped["dec1_b"],
      prepped["dec2_S"], prepped["dec2_T"], prepped["dec2_b"],
      cent)


# ------------------------- host-side operator construction -------------------------

def _conv_operators(w, b, hin, win, stride, upsample, batch):
    """Build (S, T, bias_row) so that conv(x) = sum_ki S_ki @ X @ T_ki + bias.

    X is the activation laid out as [batch*hin, win*cin] (channels minor).  The
    3x3 taps, zero padding (pad=1), stride and (decoder) nearest 2x upsample
    are folded into the constant operators.
    """
    w = np.asarray(w, np.float32)                      # [cout, cin, 3, 3] OIHW
    b = np.asarray(b, np.float32)
    cout, cin, kh, kw = w.shape
    assert kh == 3 and kw == 3
    if upsample:                                       # nearest x2, then conv s1 p1
        oh, ow = 2 * hin, 2 * win
    else:                                              # conv stride s, pad 1
        oh = (hin + 2 - 3) // stride + 1
        ow = (win + 2 - 3) // stride + 1

    s_single = np.zeros((3, oh, hin), np.float32)
    t_mat = np.zeros((3, win * cin, ow * cout), np.float32)
    for ki in range(3):
        for o in range(oh):
            if upsample:
                u = o + ki - 1
                if 0 <= u < 2 * hin:
                    s_single[ki, o, u // 2] = 1.0
            else:
                ih = stride * o + ki - 1
                if 0 <= ih < hin:
                    s_single[ki, o, ih] = 1.0
        for kj in range(3):
            wk = w[:, :, ki, kj].T                     # [cin, cout]
            for o in range(ow):
                if upsample:
                    u = o + kj - 1
                    if not 0 <= u < 2 * win:
                        continue
                    sw = u // 2
                else:
                    iw = stride * o + kj - 1
                    if not 0 <= iw < win:
                        continue
                    sw = iw
                t_mat[ki, sw * cin:(sw + 1) * cin, o * cout:(o + 1) * cout] += wk

    # batch-stacked activations -> block-diagonal S, taps stacked along rows
    eye_b = np.eye(batch, dtype=np.float32)
    s_full = np.concatenate([np.kron(eye_b, s_single[ki]) for ki in range(3)], axis=0)
    t_full = t_mat.reshape(3 * win * cin, ow * cout)
    bias_row = np.tile(b, ow)[None, :]                 # columns (ow, cout), cout minor
    return (jnp.asarray(s_full, jnp.bfloat16),
            jnp.asarray(t_full, jnp.bfloat16),
            jnp.asarray(bias_row, jnp.float32))


def init_params(key, n_channels, emb_dim, height, width, n_clusters):
    ks = jax.random.split(key, 6)

    def winit(k, shape, fan_in):
        return jax.random.normal(k, shape, jnp.float32) * (1.0 / jnp.sqrt(fan_in))

    h4, w4 = height // 4, width // 4
    return {
        # encoder (PyTorch OIHW layout)
        "enc1_w": winit(ks[0], (16, n_channels, 3, 3), n_channels * 9),
        "enc1_b": jnp.zeros((16,), jnp.float32),
        "enc2_w": winit(ks[1], (emb_dim, 16, 3, 3), 16 * 9),
        "enc2_b": jnp.zeros((emb_dim,), jnp.float32),
        # decoder
        "fc_w": winit(ks[2], (emb_dim, emb_dim * h4 * w4), emb_dim),   # [in, out]
        "fc_b": jnp.zeros((emb_dim * h4 * w4,), jnp.float32),
        "dec1_w": winit(ks[3], (16, emb_dim, 3, 3), emb_dim * 9),
        "dec1_b": jnp.zeros((16,), jnp.float32),
        "dec2_w": winit(ks[4], (n_channels, 16, 3, 3), 16 * 9),
        "dec2_b": jnp.zeros((n_channels,), jnp.float32),
        # clustering centroids (the `centroid` ctor arg of CSA_RP)
        "centroid": jax.random.normal(ks[5], (n_clusters, emb_dim), jnp.float32),
    }


def prepare_params(p, batch, height, width):
    """One-time host-side conversion into the fused kernel's constant operators."""
    emb_dim = p["enc2_w"].shape[0]
    h4, w4 = height // 4, width // 4
    pp = {}
    pp["enc1_S"], pp["enc1_T"], pp["enc1_b"] = _conv_operators(
        p["enc1_w"], p["enc1_b"], height, width, stride=2, upsample=False, batch=batch)
    pp["enc2_S"], pp["enc2_T"], pp["enc2_b"] = _conv_operators(
        p["enc2_w"], p["enc2_b"], height // 2, width // 2, stride=2, upsample=False, batch=batch)
    pp["dec1_S"], pp["dec1_T"], pp["dec1_b"] = _conv_operators(
        p["dec1_w"], p["dec1_b"], h4, w4, stride=1, upsample=True, batch=batch)
    pp["dec2_S"], pp["dec2_T"], pp["dec2_b"] = _conv_operators(
        p["dec2_w"], p["dec2_b"], height // 2, width // 2, stride=1, upsample=True, batch=batch)
    # fc: permute output columns from the NCHW view order (c, h, w) to the
    # kernel's (h, w, c) layout so its output slices straight into the decoder's
    # [batch*h4, w4*emb] activation layout (keeps nn.Linear + view(B,C,4,4) semantics).
    wfc = np.asarray(p["fc_w"], np.float32)
    bfc = np.asarray(p["fc_b"], np.float32)
    perm = np.array([c * (h4 * w4) + hh * w4 + ww
                     for hh in range(h4) for ww in range(w4) for c in range(emb_dim)])
    pp["fc_w"] = jnp.asarray(wfc[:, perm], jnp.bfloat16)
    pp["fc_b"] = jnp.asarray(bfc[perm][None, :], jnp.float32)
    pp["centroid"] = jnp.asarray(p["centroid"], jnp.float32)
    return pp


# ------------------------- model forward -------------------------

@functools.partial(jax.jit, static_argnames=("pretrained",))
def csa_rp_forward(prepped, RP, pretrained=True):
    B, C, H, W = RP.shape
    x2d = RP.astype(jnp.float32).transpose(0, 2, 3, 1).reshape(B * H, W * C)
    recon2d, emb, q = _fused_forward(prepped, x2d, B)
    recon = recon2d.reshape(B, H, W, C).transpose(0, 3, 1, 2)
    return {"recon_ori": [(recon, RP)],
            "pred": q if pretrained else None,
            "emb": emb}


# ------------------------- pure-JAX reference (f32) -------------------------

@jax.jit
def reference_forward(p, rp):
    def conv(x, w, b, stride):
        y = lax.conv_general_dilated(
            x, w, window_strides=(stride, stride), padding=((1, 1), (1, 1)),
            dimension_numbers=("NCHW", "OIHW", "NCHW"))
        return y + b[None, :, None, None]

    up = lambda x: jnp.repeat(jnp.repeat(x, 2, axis=2), 2, axis=3)
    h1 = jax.nn.relu(conv(rp, p["enc1_w"], p["enc1_b"], 2))
    h2 = jax.nn.relu(conv(h1, p["enc2_w"], p["enc2_b"], 2))
    emb = jnp.mean(h2, axis=(2, 3))
    d = jax.nn.relu(emb @ p["fc_w"] + p["fc_b"])
    bsz, e = emb.shape
    h4, w4 = rp.shape[2] // 4, rp.shape[3] // 4
    d = d.reshape(bsz, e, h4, w4)
    h3 = jax.nn.relu(conv(up(d), p["dec1_w"], p["dec1_b"], 1))
    recon = jax.nn.sigmoid(conv(up(h3), p["dec2_w"], p["dec2_b"], 1))
    cent = p["centroid"]
    d2 = jnp.sum((emb[:, None, :] - cent[None, :, :]) ** 2, axis=-1)
    q = 1.0 / (1.0 + d2)
    q = q / jnp.sum(q, axis=1, keepdims=True)
    return recon, emb, q


# ------------------------- demo -------------------------

if __name__ == "__main__":
    key = jax.random.PRNGKey(0)
    k_in, k_p = jax.random.split(key)

    B, C, H, W = 2, 4, 16, 16          # RP: recurrence-plot input, NCHW
    emb_dim, n_clusters = 32, 4

    RP = jax.random.uniform(k_in, (B, C, H, W), jnp.float32)
    params = init_params(k_p, C, emb_dim, H, W, n_clusters)
    prepped = prepare_params(params, B, H, W)

    out = csa_rp_forward(prepped, RP, pretrained=True)
    recon = jax.block_until_ready(out["recon_ori"][0][0])
    emb = jax.block_until_ready(out["emb"])
    pred = jax.block_until_ready(out["pred"])

    assert recon.shape == (B, C, H, W)
    assert emb.shape == (B, emb_dim)
    assert pred.shape == (B, n_clusters)

    ref_recon, ref_emb, ref_q = reference_forward(params, RP)
    assert bool(jnp.all(jnp.isfinite(recon)))
    assert bool(jnp.allclose(recon, ref_recon, atol=5e-2)), "recon mismatch"
    assert bool(jnp.allclose(emb, ref_emb, atol=5e-2)), "emb mismatch"
    assert bool(jnp.allclose(pred, ref_q, atol=5e-2)), "pred mismatch"
    assert bool(jnp.allclose(jnp.sum(pred, axis=-1), 1.0, atol=1e-5))

    print("KERNEL_OK")
</pallas_src>

<mosaic_0001>
module attributes {stable_mosaic.version = 11 : i64} {
  func.func @_csa_rp_kernel(%arg0: memref<32x64xf32, #tpu.memory_space<vmem>>, %arg1: memref<48x32xbf16, #tpu.memory_space<vmem>>, %arg2: memref<192x128xbf16, #tpu.memory_space<vmem>>, %arg3: memref<1x128xf32, #tpu.memory_space<vmem>>, %arg4: memref<24x16xbf16, #tpu.memory_space<vmem>>, %arg5: memref<384x128xbf16, #tpu.memory_space<vmem>>, %arg6: memref<1x128xf32, #tpu.memory_space<vmem>>, %arg7: memref<32x512xbf16, #tpu.memory_space<vmem>>, %arg8: memref<1x512xf32, #tpu.memory_space<vmem>>, %arg9: memref<48x8xbf16, #tpu.memory_space<vmem>>, %arg10: memref<384x128xbf16, #tpu.memory_space<vmem>>, %arg11: memref<1x128xf32, #tpu.memory_space<vmem>>, %arg12: memref<96x16xbf16, #tpu.memory_space<vmem>>, %arg13: memref<384x64xbf16, #tpu.memory_space<vmem>>, %arg14: memref<1x64xf32, #tpu.memory_space<vmem>>, %arg15: memref<4x32xf32, #tpu.memory_space<vmem>>, %arg16: memref<32x64xf32, #tpu.memory_space<vmem>>, %arg17: memref<2x32xf32, #tpu.memory_space<vmem>>, %arg18: memref<2x4xf32, #tpu.memory_space<vmem>>, %arg19: memref<8x128xf32, #tpu.memory_space<vmem>>) attributes {dimension_semantics = [], scalar_prefetch = 0 : i64, scratch_operands = 1 : i64, tpu.core_type = #tpu.core_type<tc>} {
    %c0 = arith.constant 0 : index
    %c0_0 = arith.constant 0 : index
    %0 = vector.load %arg0[%c0, %c0_0] : memref<32x64xf32, #tpu.memory_space<vmem>>, vector<32x64xf32>
    %1 = arith.truncf %0 : vector<32x64xf32> to vector<32x64xbf16>
    %c0_1 = arith.constant 0 : index
    %c0_2 = arith.constant 0 : index
    %2 = vector.load %arg1[%c0_1, %c0_2] : memref<48x32xbf16, #tpu.memory_space<vmem>>, vector<16x32xbf16>
    %c0_3 = arith.constant 0 : index
    %c0_4 = arith.constant 0 : index
    %3 = vector.load %arg2[%c0_3, %c0_4] : memref<192x128xbf16, #tpu.memory_space<vmem>>, vector<64x128xbf16>
    %cst = arith.constant dense<0.000000e+00> : vector<16x64xf32>
    %4 = tpu.matmul %2, %1, %cst {dimension_numbers = #tpu.dot_dimension_numbers<[1], [0], [0], [1], [0, 0, 1, 1], [], []>} : vector<16x32xbf16>, vector<32x64xbf16>, vector<16x64xf32> -> vector<16x64xf32>
    %5 = arith.truncf %4 : vector<16x64xf32> to vector<16x64xbf16>
    %cst_5 = arith.constant dense<0.000000e+00> : vector<16x128xf32>
    %6 = tpu.matmul %5, %3, %cst_5 {dimension_numbers = #tpu.dot_dimension_numbers<[1], [0], [0], [1], [0, 0, 1, 1], [], []>} : vector<16x64xbf16>, vector<64x128xbf16>, vector<16x128xf32> -> vector<16x128xf32>
    %c16 = arith.constant 16 : index
    %c0_6 = arith.constant 0 : index
    %7 = vector.load %arg1[%c16, %c0_6] : memref<48x32xbf16, #tpu.memory_space<vmem>>, vector<16x32xbf16>
    %c64 = arith.constant 64 : index
    %c0_7 = arith.constant 0 : index
    %8 = vector.load %arg2[%c64, %c0_7] : memref<192x128xbf16, #tpu.memory_space<vmem>>, vector<64x128xbf16>
    %cst_8 = arith.constant dense<0.000000e+00> : vector<16x64xf32>
    %9 = tpu.matmul %7, %1, %cst_8 {dimension_numbers = #tpu.dot_dimension_numbers<[1], [0], [0], [1], [0, 0, 1, 1], [], []>} : vector<16x32xbf16>, vector<32x64xbf16>, vector<16x64xf32> -> vector<16x64xf32>
    %10 = arith.truncf %9 : vector<16x64xf32> to vector<16x64xbf16>
    %cst_9 = arith.constant dense<0.000000e+00> : vector<16x128xf32>
    %11 = tpu.matmul %10, %8, %cst_9 {dimension_numbers = #tpu.dot_dimension_numbers<[1], [0], [0], [1], [0, 0, 1, 1], [], []>} : vector<16x64xbf16>, vector<64x128xbf16>, vector<16x128xf32> -> vector<16x128xf32>
    %12 = arith.addf %6, %11 : vector<16x128xf32>
    %c32 = arith.constant 32 : index
    %c0_10 = arith.constant 0 : index
    %13 = vector.load %arg1[%c32, %c0_10] : memref<48x32xbf16, #tpu.memory_space<vmem>>, vector<16x32xbf16>
    %c128 = arith.constant 128 : index
    %c0_11 = arith.constant 0 : index
    %14 = vector.load %arg2[%c128, %c0_11] : memref<192x128xbf16, #tpu.memory_space<vmem>>, vector<64x128xbf16>
    %cst_12 = arith.constant dense<0.000000e+00> : vector<16x64xf32>
    %15 = tpu.matmul %13, %1, %cst_12 {dimension_numbers = #tpu.dot_dimension_numbers<[1], [0], [0], [1], [0, 0, 1, 1], [], []>} : vector<16x32xbf16>, vector<32x64xbf16>, vector<16x64xf32> -> vector<16x64xf32>
    %16 = arith.truncf %15 : vector<16x64xf32> to vector<16x64xbf16>
    %cst_13 = arith.constant dense<0.000000e+00> : vector<16x128xf32>
    %17 = tpu.matmul %16, %14, %cst_13 {dimension_numbers = #tpu.dot_dimension_numbers<[1], [0], [0], [1], [0, 0, 1, 1], [], []>} : vector<16x64xbf16>, vector<64x128xbf16>, vector<16x128xf32> -> vector<16x128xf32>
    %18 = arith.addf %12, %17 : vector<16x128xf32>
    %c0_14 = arith.constant 0 : index
    %c0_15 = arith.constant 0 : index
    %19 = vector.load %arg3[%c0_14, %c0_15] : memref<1x128xf32, #tpu.memory_space<vmem>>, vector<1x128xf32>
    %20 = vector.broadcast %19 : vector<1x128xf32> to vector<16x128xf32>
    %21 = arith.addf %18, %20 : vector<16x128xf32>
    %cst_16 = arith.constant 0.000000e+00 : f32
    %22 = vector.broadcast %cst_16 : f32 to vector<16x128xf32>
    %23 = arith.maximumf %21, %22 : vector<16x128xf32>
    %24 = arith.truncf %23 : vector<16x128xf32> to vector<16x128xbf16>
    %c0_17 = arith.constant 0 : index
    %c0_18 = arith.constant 0 : index
    %25 = vector.load %arg4[%c0_17, %c0_18] : memref<24x16xbf16, #tpu.memory_space<vmem>>, vector<8x16xbf16>
    %c0_19 = arith.constant 0 : index
    %c0_20 = arith.constant 0 : index
    %26 = vector.load %arg5[%c0_19, %c0_20] : memref<384x128xbf16, #tpu.memory_space<vmem>>, vector<128x128xbf16>
    %cst_21 = arith.constant dense<0.000000e+00> : vector<8x128xf32>
    %27 = tpu.matmul %25, %24, %cst_21 {dimension_numbers = #tpu.dot_dimension_numbers<[1], [0], [0], [1], [0, 0, 1, 1], [], []>} : vector<8x16xbf16>, vector<16x128xbf16>, vector<8x128xf32> -> vector<8x128xf32>
    %28 = arith.truncf %27 : vector<8x128xf32> to vector<8x128xbf16>
    %cst_22 = arith.constant dense<0.000000e+00> : vector<8x128xf32>
    %29 = tpu.matmul %28, %26, %cst_22 {dimension_numbers = #tpu.dot_dimension_numbers<[1], [0], [0], [1], [0, 0, 1, 1], [], []>} : vector<8x128xbf16>, vector<128x128xbf16>, vector<8x128xf32> -> vector<8x128xf32>
    %c8 = arith.constant 8 : index
    %c0_23 = arith.constant 0 : index
    %30 = vector.load %arg4[%c8, %c0_23] : memref<24x16xbf16, #tpu.memory_space<vmem>>, vector<8x16xbf16>
    %c128_24 = arith.constant 128 : index
    %c0_25 = arith.constant 0 : index
    %31 = vector.load %arg5[%c128_24, %c0_25] : memref<384x128xbf16, #tpu.memory_space<vmem>>, vector<128x128xbf16>
    %cst_26 = arith.constant dense<0.000000e+00> : vector<8x128xf32>
    %32 = tpu.matmul %30, %24, %cst_26 {dimension_numbers = #tpu.dot_dimension_numbers<[1], [0], [0], [1], [0, 0, 1, 1], [], []>} : vector<8x16xbf16>, vector<16x128xbf16>, vector<8x128xf32> -> vector<8x128xf32>
    %33 = arith.truncf %32 : vector<8x128xf32> to vector<8x128xbf16>
    %cst_27 = arith.constant dense<0.000000e+00> : vector<8x128xf32>
    %34 = tpu.matmul %33, %31, %cst_27 {dimension_numbers = #tpu.dot_dimension_numbers<[1], [0], [0], [1], [0, 0, 1, 1], [], []>} : vector<8x128xbf16>, vector<128x128xbf16>, vector<8x128xf32> -> vector<8x128xf32>
    %35 = arith.addf %29, %34 : vector<8x128xf32>
    %c16_28 = arith.constant 16 : index
    %c0_29 = arith.constant 0 : index
    %36 = vector.load %arg4[%c16_28, %c0_29] : memref<24x16xbf16, #tpu.memory_space<vmem>>, vector<8x16xbf16>
    %c256 = arith.constant 256 : index
    %c0_30 = arith.constant 0 : index
    %37 = vector.load %arg5[%c256, %c0_30] : memref<384x128xbf16, #tpu.memory_space<vmem>>, vector<128x128xbf16>
    %cst_31 = arith.constant dense<0.000000e+00> : vector<8x128xf32>
    %38 = tpu.matmul %36, %24, %cst_31 {dimension_numbers = #tpu.dot_dimension_numbers<[1], [0], [0], [1], [0, 0, 1, 1], [], []>} : vector<8x16xbf16>, vector<16x128xbf16>, vector<8x128xf32> -> vector<8x128xf32>
    %39 = arith.truncf %38 : vector<8x128xf32> to vector<8x128xbf16>
    %cst_32 = arith.constant dense<0.000000e+00> : vector<8x128xf32>
    %40 = tpu.matmul %39, %37, %cst_32 {dimension_numbers = #tpu.dot_dimension_numbers<[1], [0], [0], [1], [0, 0, 1, 1], [], []>} : vector<8x128xbf16>, vector<128x128xbf16>, vector<8x128xf32> -> vector<8x128xf32>
    %41 = arith.addf %35, %40 : vector<8x128xf32>
    %c0_33 = arith.constant 0 : index
    %c0_34 = arith.constant 0 : index
    %42 = vector.load %arg6[%c0_33, %c0_34] : memref<1x128xf32, #tpu.memory_space<vmem>>, vector<1x128xf32>
    %43 = vector.broadcast %42 : vector<1x128xf32> to vector<8x128xf32>
    %44 = arith.addf %41, %43 : vector<8x128xf32>
    %cst_35 = arith.constant 0.000000e+00 : f32
    %45 = vector.broadcast %cst_35 : f32 to vector<8x128xf32>
    %46 = arith.maximumf %44, %45 : vector<8x128xf32>
    %47 = vector.extract_strided_slice %46 {offsets = [0, 0], sizes = [4, 128], strides = [1, 1]} : vector<8x128xf32> to vector<4x128xf32>
    %cst_36 = arith.constant dense<0.000000e+00> : vector<128xf32>
    %48 = vector.multi_reduction <add>, %47, %cst_36 [0] : vector<4x128xf32> to vector<128xf32>
    %49 = vector.shape_cast %48 : vector<128xf32> to vector<1x128xf32>
    %50 = vector.extract_strided_slice %49 {offsets = [0, 0], sizes = [1, 32], strides = [1, 1]} : vector<1x128xf32> to vector<1x32xf32>
    %51 = vector.extract_strided_slice %49 {offsets = [0, 32], sizes = [1, 32], strides = [1, 1]} : vector<1x128xf32> to vector<1x32xf32>
    %52 = arith.addf %50, %51 : vector<1x32xf32>
    %53 = vector.extract_strided_slice %49 {offsets = [0, 64], sizes = [1, 32], strides = [1, 1]} : vector<1x128xf32> to vector<1x32xf32>
    %54 = arith.addf %52, %53 : vector<1x32xf32>
    %55 = vector.extract_strided_slice %49 {offsets = [0, 96], sizes = [1, 32], strides = [1, 1]} : vector<1x128xf32> to vector<1x32xf32>
    %56 = arith.addf %54, %55 : vector<1x32xf32>
    %cst_37 = arith.constant 6.250000e-02 : f32
    %57 = vector.broadcast %cst_37 : f32 to vector<1x32xf32>
    %58 = arith.mulf %56, %57 : vector<1x32xf32>
    %c0_38 = arith.constant 0 : index
    %c0_39 = arith.constant 0 : index
    %59 = vector.load %arg17[%c0_38, %c0_39] : memref<2x32xf32, #tpu.memory_space<vmem>>, vector<1x32xf32>
    tpu.vector_store %arg17[%c0_38, %c0_39], %58 {strides = array<i32>} : memref<2x32xf32, #tpu.memory_space<vmem>>, vector<1x32xf32>,
    %60 = vector.extract_strided_slice %46 {offsets = [4, 0], sizes = [4, 128], strides = [1, 1]} : vector<8x128xf32> to vector<4x128xf32>
    %cst_40 = arith.constant dense<0.000000e+00> : vector<128xf32>
    %61 = vector.multi_reduction <add>, %60, %cst_40 [0] : vector<4x128xf32> to vector<128xf32>
    %62 = vector.shape_cast %61 : vector<128xf32> to vector<1x128xf32>
    %63 = vector.extract_strided_slice %62 {offsets = [0, 0], sizes = [1, 32], strides = [1, 1]} : vector<1x128xf32> to vector<1x32xf32>
    %64 = vector.extract_strided_slice %62 {offsets = [0, 32], sizes = [1, 32], strides = [1, 1]} : vector<1x128xf32> to vector<1x32xf32>
    %65 = arith.addf %63, %64 : vector<1x32xf32>
    %66 = vector.extract_strided_slice %62 {offsets = [0, 64], sizes = [1, 32], strides = [1, 1]} : vector<1x128xf32> to vector<1x32xf32>
    %67 = arith.addf %65, %66 : vector<1x32xf32>
    %68 = vector.extract_strided_slice %62 {offsets = [0, 96], sizes = [1, 32], strides = [1, 1]} : vector<1x128xf32> to vector<1x32xf32>
    %69 = arith.addf %67, %68 : vector<1x32xf32>
    %cst_41 = arith.constant 6.250000e-02 : f32
    %70 = vector.broadcast %cst_41 : f32 to vector<1x32xf32>
    %71 = arith.mulf %69, %70 : vector<1x32xf32>
    %c1 = arith.constant 1 : index
    %c0_42 = arith.constant 0 : index
    %72 = vector.load %arg17[%c1, %c0_42] : memref<2x32xf32, #tpu.memory_space<vmem>>, vector<1x32xf32>
    tpu.vector_store %arg17[%c1, %c0_42], %71 {strides = array<i32>} : memref<2x32xf32, #tpu.memory_space<vmem>>, vector<1x32xf32>,
    %c0_43 = arith.constant 0 : index
    %c0_44 = arith.constant 0 : index
    %73 = vector.load %arg17[%c0_43, %c0_44] : memref<2x32xf32, #tpu.memory_space<vmem>>, vector<2x32xf32>
    %74 = arith.truncf %73 : vector<2x32xf32> to vector<2x32xbf16>
    %c0_45 = arith.constant 0 : index
    %c0_46 = arith.constant 0 : index
    %75 = vector.load %arg7[%c0_45, %c0_46] : memref<32x512xbf16, #tpu.memory_space<vmem>>, vector<32x512xbf16>
    %cst_47 = arith.constant dense<0.000000e+00> : vector<2x512xf32>
    %76 = tpu.matmul %74, %75, %cst_47 {dimension_numbers = #tpu.dot_dimension_numbers<[1], [0], [0], [1], [0, 0, 1, 1], [], []>} : vector<2x32xbf16>, vector<32x512xbf16>, vector<2x512xf32> -> vector<2x512xf32>
    %c0_48 = arith.constant 0 : index
    %c0_49 = arith.constant 0 : index
    %77 = vector.load %arg8[%c0_48, %c0_49] : memref<1x512xf32, #tpu.memory_space<vmem>>, vector<1x512xf32>
    %78 = vector.broadcast %77 : vector<1x512xf32> to vector<2x512xf32>
    %79 = arith.addf %76, %78 : vector<2x512xf32>
    %cst_50 = arith.constant 0.000000e+00 : f32
    %80 = vector.broadcast %cst_50 : f32 to vector<2x512xf32>
    %81 = arith.maximumf %79, %80 : vector<2x512xf32>
    %82 = vector.extract_strided_slice %81 {offsets = [0, 0], sizes = [1, 128], strides = [1, 1]} : vector<2x512xf32> to vector<1x128xf32>
    %c0_51 = arith.constant 0 : index
    %c0_52 = arith.constant 0 : index
    %83 = vector.load %arg19[%c0_51, %c0_52] : memref<8x128xf32, #tpu.memory_space<vmem>>, vector<1x128xf32>
    tpu.vector_store %arg19[%c0_51, %c0_52], %82 {strides = array<i32>} : memref<8x128xf32, #tpu.memory_space<vmem>>, vector<1x128xf32>,
    %84 = vector.extract_strided_slice %81 {offsets = [0, 128], sizes = [1, 128], strides = [1, 1]} : vector<2x512xf32> to vector<1x128xf32>
    %c1_53 = arith.constant 1 : index
    %c0_54 = arith.constant 0 : index
    %85 = vector.load %arg19[%c1_53, %c0_54] : memref<8x128xf32, #tpu.memory_space<vmem>>, vector<1x128xf32>
    tpu.vector_store %arg19[%c1_53, %c0_54], %84 {strides = array<i32>} : memref<8x128xf32, #tpu.memory_space<vmem>>, vector<1x128xf32>,
    %86 = vector.extract_strided_slice %81 {offsets = [0, 256], sizes = [1, 128], strides = [1, 1]} : vector<2x512xf32> to vector<1x128xf32>
    %c2 = arith.constant 2 : index
    %c0_55 = arith.constant 0 : index
    %87 = vector.load %arg19[%c2, %c0_55] : memref<8x128xf32, #tpu.memory_space<vmem>>, vector<1x128xf32>
    tpu.vector_store %arg19[%c2, %c0_55], %86 {strides = array<i32>} : memref<8x128xf32, #tpu.memory_space<vmem>>, vector<1x128xf32>,
    %88 = vector.extract_strided_slice %81 {offsets = [0, 384], sizes = [1, 128], strides = [1, 1]} : vector<2x512xf32> to vector<1x128xf32>
    %c3 = arith.constant 3 : index
    %c0_56 = arith.constant 0 : index
    %89 = vector.load %arg19[%c3, %c0_56] : memref<8x128xf32, #tpu.memory_space<vmem>>, vector<1x128xf32>
    tpu.vector_store %arg19[%c3, %c0_56], %88 {strides = array<i32>} : memref<8x128xf32, #tpu.memory_space<vmem>>, vector<1x128xf32>,
    %90 = vector.extract_strided_slice %81 {offsets = [1, 0], sizes = [1, 128], strides = [1, 1]} : vector<2x512xf32> to vector<1x128xf32>
    %c4 = arith.constant 4 : index
    %c0_57 = arith.constant 0 : index
    %91 = vector.load %arg19[%c4, %c0_57] : memref<8x128xf32, #tpu.memory_space<vmem>>, vector<1x128xf32>
    tpu.vector_store %arg19[%c4, %c0_57], %90 {strides = array<i32>} : memref<8x128xf32, #tpu.memory_space<vmem>>, vector<1x128xf32>,
    %92 = vector.extract_strided_slice %81 {offsets = [1, 128], sizes = [1, 128], strides = [1, 1]} : vector<2x512xf32> to vector<1x128xf32>
    %c5 = arith.constant 5 : index
    %c0_58 = arith.constant 0 : index
    %93 = vector.load %arg19[%c5, %c0_58] : memref<8x128xf32, #tpu.memory_space<vmem>>, vector<1x128xf32>
    tpu.vector_store %arg19[%c5, %c0_58], %92 {strides = array<i32>} : memref<8x128xf32, #tpu.memory_space<vmem>>, vector<1x128xf32>,
    %94 = vector.extract_strided_slice %81 {offsets = [1, 256], sizes = [1, 128], strides = [1, 1]} : vector<2x512xf32> to vector<1x128xf32>
    %c6 = arith.constant 6 : index
    %c0_59 = arith.constant 0 : index
    %95 = vector.load %arg19[%c6, %c0_59] : memref<8x128xf32, #tpu.memory_space<vmem>>, vector<1x128xf32>
    tpu.vector_store %arg19[%c6, %c0_59], %94 {strides = array<i32>} : memref<8x128xf32, #tpu.memory_space<vmem>>, vector<1x128xf32>,
    %96 = vector.extract_strided_slice %81 {offsets = [1, 384], sizes = [1, 128], strides = [1, 1]} : vector<2x512xf32> to vector<1x128xf32>
    %c7 = arith.constant 7 : index
    %c0_60 = arith.constant 0 : index
    %97 = vector.load %arg19[%c7, %c0_60] : memref<8x128xf32, #tpu.memory_space<vmem>>, vector<1x128xf32>
    tpu.vector_store %arg19[%c7, %c0_60], %96 {strides = array<i32>} : memref<8x128xf32, #tpu.memory_space<vmem>>, vector<1x128xf32>,
    %c0_61 = arith.constant 0 : index
    %c0_62 = arith.constant 0 : index
    %98 = vector.load %arg19[%c0_61, %c0_62] : memref<8x128xf32, #tpu.memory_space<vmem>>, vector<8x128xf32>
    %99 = arith.truncf %98 : vector<8x128xf32> to vector<8x128xbf16>
    %c0_63 = arith.constant 0 : index
    %c0_64 = arith.constant 0 : index
    %100 = vector.load %arg9[%c0_63, %c0_64] : memref<48x8xbf16, #tpu.memory_space<vmem>>, vector<16x8xbf16>
    %c0_65 = arith.constant 0 : index
    %c0_66 = arith.constant 0 : index
    %101 = vector.load %arg10[%c0_65, %c0_66] : memref<384x128xbf16, #tpu.memory_space<vmem>>, vector<128x128xbf16>
    %cst_67 = arith.constant dense<0.000000e+00> : vector<16x128xf32>
    %102 = tpu.matmul %100, %99, %cst_67 {dimension_numbers = #tpu.dot_dimension_numbers<[1], [0], [0], [1], [0, 0, 1, 1], [], []>} : vector<16x8xbf16>, vector<8x128xbf16>, vector<16x128xf32> -> vector<16x128xf32>
    %103 = arith.truncf %102 : vector<16x128xf32> to vector<16x128xbf16>
    %cst_68 = arith.constant dense<0.000000e+00> : vector<16x128xf32>
    %104 = tpu.matmul %103, %101, %cst_68 {dimension_numbers = #tpu.dot_dimension_numbers<[1], [0], [0], [1], [0, 0, 1, 1], [], []>} : vector<16x128xbf16>, vector<128x128xbf16>, vector<16x128xf32> -> vector<16x128xf32>
    %c16_69 = arith.constant 16 : index
    %c0_70 = arith.constant 0 : index
    %105 = vector.load %arg9[%c16_69, %c0_70] : memref<48x8xbf16, #tpu.memory_space<vmem>>, vector<16x8xbf16>
    %c128_71 = arith.constant 128 : index
    %c0_72 = arith.constant 0 : index
    %106 = vector.load %arg10[%c128_71, %c0_72] : memref<384x128xbf16, #tpu.memory_space<vmem>>, vector<128x128xbf16>
    %cst_73 = arith.constant dense<0.000000e+00> : vector<16x128xf32>
    %107 = tpu.matmul %105, %99, %cst_73 {dimension_numbers = #tpu.dot_dimension_numbers<[1], [0], [0], [1], [0, 0, 1, 1], [], []>} : vector<16x8xbf16>, vector<8x128xbf16>, vector<16x128xf32> -> vector<16x128xf32>
    %108 = arith.truncf %107 : vector<16x128xf32> to vector<16x128xbf16>
    %cst_74 = arith.constant dense<0.000000e+00> : vector<16x128xf32>
    %109 = tpu.matmul %108, %106, %cst_74 {dimension_numbers = #tpu.dot_dimension_numbers<[1], [0], [0], [1], [0, 0, 1, 1], [], []>} : vector<16x128xbf16>, vector<128x128xbf16>, vector<16x128xf32> -> vector<16x128xf32>
    %110 = arith.addf %104, %109 : vector<16x128xf32>
    %c32_75 = arith.constant 32 : index
    %c0_76 = arith.constant 0 : index
    %111 = vector.load %arg9[%c32_75, %c0_76] : memref<48x8xbf16, #tpu.memory_space<vmem>>, vector<16x8xbf16>
    %c256_77 = arith.constant 256 : index
    %c0_78 = arith.constant 0 : index
    %112 = vector.load %arg10[%c256_77, %c0_78] : memref<384x128xbf16, #tpu.memory_space<vmem>>, vector<128x128xbf16>
    %cst_79 = arith.constant dense<0.000000e+00> : vector<16x128xf32>
    %113 = tpu.matmul %111, %99, %cst_79 {dimension_numbers = #tpu.dot_dimension_numbers<[1], [0], [0], [1], [0, 0, 1, 1], [], []>} : vector<16x8xbf16>, vector<8x128xbf16>, vector<16x128xf32> -> vector<16x128xf32>
    %114 = arith.truncf %113 : vector<16x128xf32> to vector<16x128xbf16>
    %cst_80 = arith.constant dense<0.000000e+00> : vector<16x128xf32>
    %115 = tpu.matmul %114, %112, %cst_80 {dimension_numbers = #tpu.dot_dimension_numbers<[1], [0], [0], [1], [0, 0, 1, 1], [], []>} : vector<16x128xbf16>, vector<128x128xbf16>, vector<16x128xf32> -> vector<16x128xf32>
    %116 = arith.addf %110, %115 : vector<16x128xf32>
    %c0_81 = arith.constant 0 : index
    %c0_82 = arith.constant 0 : index
    %117 = vector.load %arg11[%c0_81, %c0_82] : memref<1x128xf32, #tpu.memory_space<vmem>>, vector<1x128xf32>
    %118 = vector.broadcast %117 : vector<1x128xf32> to vector<16x128xf32>
    %119 = arith.addf %116, %118 : vector<16x128xf32>
    %cst_83 = arith.constant 0.000000e+00 : f32
    %120 = vector.broadcast %cst_83 : f32 to vector<16x128xf32>
    %121 = arith.maximumf %119, %120 : vector<16x128xf32>
    %122 = arith.truncf %121 : vector<16x128xf32> to vector<16x128xbf16>
    %c0_84 = arith.constant 0 : index
    %c0_85 = arith.constant 0 : index
    %123 = vector.load %arg12[%c0_84, %c0_85] : memref<96x16xbf16, #tpu.memory_space<vmem>>, vector<32x16xbf16>
    %c0_86 = arith.constant 0 : index
    %c0_87 = arith.constant 0 : index
    %124 = vector.load %arg13[%c0_86, %c0_87] : memref<384x64xbf16, #tpu.memory_space<vmem>>, vector<128x64xbf16>
    %cst_88 = arith.constant dense<0.000000e+00> : vector<32x128xf32>
    %125 = tpu.matmul %123, %122, %cst_88 {dimension_numbers = #tpu.dot_dimension_numbers<[1], [0], [0], [1], [0, 0, 1, 1], [], []>} : vector<32x16xbf16>, vector<16x128xbf16>, vector<32x128xf32> -> vector<32x128xf32>
    %126 = arith.truncf %125 : vector<32x128xf32> to vector<32x128xbf16>
    %cst_89 = arith.constant dense<0.000000e+00> : vector<32x64xf32>
    %127 = tpu.matmul %126, %124, %cst_89 {dimension_numbers = #tpu.dot_dimension_numbers<[1], [0], [0], [1], [0, 0, 1, 1], [], []>} : vector<32x128xbf16>, vector<128x64xbf16>, vector<32x64xf32> -> vector<32x64xf32>
    %c32_90 = arith.constant 32 : index
    %c0_91 = arith.constant 0 : index
    %128 = vector.load %arg12[%c32_90, %c0_91] : memref<96x16xbf16, #tpu.memory_space<vmem>>, vector<32x16xbf16>
    %c128_92 = arith.constant 128 : index
    %c0_93 = arith.constant 0 : index
    %129 = vector.load %arg13[%c128_92, %c0_93] : memref<384x64xbf16, #tpu.memory_space<vmem>>, vector<128x64xbf16>
    %cst_94 = arith.constant dense<0.000000e+00> : vector<32x128xf32>
    %130 = tpu.matmul %128, %122, %cst_94 {dimension_numbers = #tpu.dot_dimension_numbers<[1], [0], [0], [1], [0, 0, 1, 1], [], []>} : vector<32x16xbf16>, vector<16x128xbf16>, vector<32x128xf32> -> vector<32x128xf32>
    %131 = arith.truncf %130 : vector<32x128xf32> to vector<32x128xbf16>
    %cst_95 = arith.constant dense<0.000000e+00> : vector<32x64xf32>
    %132 = tpu.matmul %131, %129, %cst_95 {dimension_numbers = #tpu.dot_dimension_numbers<[1], [0], [0], [1], [0, 0, 1, 1], [], []>} : vector<32x128xbf16>, vector<128x64xbf16>, vector<32x64xf32> -> vector<32x64xf32>
    %133 = arith.addf %127, %132 : vector<32x64xf32>
    %c64_96 = arith.constant 64 : index
    %c0_97 = arith.constant 0 : index
    %134 = vector.load %arg12[%c64_96, %c0_97] : memref<96x16xbf16, #tpu.memory_space<vmem>>, vector<32x16xbf16>
    %c256_98 = arith.constant 256 : index
    %c0_99 = arith.constant 0 : index
    %135 = vector.load %arg13[%c256_98, %c0_99] : memref<384x64xbf16, #tpu.memory_space<vmem>>, vector<128x64xbf16>
    %cst_100 = arith.constant dense<0.000000e+00> : vector<32x128xf32>
    %136 = tpu.matmul %134, %122, %cst_100 {dimension_numbers = #tpu.dot_dimension_numbers<[1], [0], [0], [1], [0, 0, 1, 1], [], []>} : vector<32x16xbf16>, vector<16x128xbf16>, vector<32x128xf32> -> vector<32x128xf32>
    %137 = arith.truncf %136 : vector<32x128xf32> to vector<32x128xbf16>
    %cst_101 = arith.constant dense<0.000000e+00> : vector<32x64xf32>
    %138 = tpu.matmul %137, %135, %cst_101 {dimension_numbers = #tpu.dot_dimension_numbers<[1], [0], [0], [1], [0, 0, 1, 1], [], []>} : vector<32x128xbf16>, vector<128x64xbf16>, vector<32x64xf32> -> vector<32x64xf32>
    %139 = arith.addf %133, %138 : vector<32x64xf32>
    %c0_102 = arith.constant 0 : index
    %c0_103 = arith.constant 0 : index
    %140 = vector.load %arg14[%c0_102, %c0_103] : memref<1x64xf32, #tpu.memory_space<vmem>>, vector<1x64xf32>
    %141 = vector.broadcast %140 : vector<1x64xf32> to vector<32x64xf32>
    %142 = arith.addf %139, %141 : vector<32x64xf32>
    %143 = arith.negf %142 : vector<32x64xf32>
    %144 = math.exp %143 : vector<32x64xf32>
    %cst_104 = arith.constant 1.000000e+00 : f32
    %145 = vector.broadcast %cst_104 : f32 to vector<32x64xf32>
    %146 = arith.addf %145, %144 : vector<32x64xf32>
    %147 = arith.divf %145, %146 : vector<32x64xf32>
    %c0_105 = arith.constant 0 : index
    %c0_106 = arith.constant 0 : index
    %148 = vector.load %arg16[%c0_105, %c0_106] : memref<32x64xf32, #tpu.memory_space<vmem>>, vector<32x64xf32>
    tpu.vector_store %arg16[%c0_105, %c0_106], %147 {strides = array<i32>} : memref<32x64xf32, #tpu.memory_space<vmem>>, vector<32x64xf32>,
    %c0_107 = arith.constant 0 : index
    %c0_108 = arith.constant 0 : index
    %149 = vector.load %arg15[%c0_107, %c0_108] : memref<4x32xf32, #tpu.memory_space<vmem>>, vector<4x32xf32>
    %150 = vector.extract_strided_slice %149 {offsets = [0, 0], sizes = [1, 32], strides = [1, 1]} : vector<4x32xf32> to vector<1x32xf32>
    %151 = vector.broadcast %150 : vector<1x32xf32> to vector<2x32xf32>
    %152 = arith.subf %73, %151 : vector<2x32xf32>
    %153 = arith.mulf %152, %152 : vector<2x32xf32>
    %cst_109 = arith.constant dense<0.000000e+00> : vector<2xf32>
    %154 = vector.multi_reduction <add>, %153, %cst_109 [1] : vector<2x32xf32> to vector<2xf32>
    %155 = vector.shape_cast %154 : vector<2xf32> to vector<2x1xf32>
    %cst_110 = arith.constant 1.000000e+00 : f32
    %156 = vector.broadcast %cst_110 : f32 to vector<2x1xf32>
    %157 = arith.addf %156, %155 : vector<2x1xf32>
    %cst_111 = arith.constant 1.000000e+00 : f32
    %158 = vector.broadcast %cst_111 : f32 to vector<2x1xf32>
    %159 = arith.divf %158, %157 : vector<2x1xf32>
    %c0_112 = arith.constant 0 : index
    %c0_113 = arith.constant 0 : index
    %160 = vector.load %arg18[%c0_112, %c0_113] : memref<2x4xf32, #tpu.memory_space<vmem>>, vector<2x1xf32>
    tpu.vector_store %arg18[%c0_112, %c0_113], %159 {strides = array<i32>} : memref<2x4xf32, #tpu.memory_space<vmem>>, vector<2x1xf32>,
    %161 = vector.extract_strided_slice %149 {offsets = [1, 0], sizes = [1, 32], strides = [1, 1]} : vector<4x32xf32> to vector<1x32xf32>
    %162 = vector.broadcast %161 : vector<1x32xf32> to vector<2x32xf32>
    %163 = arith.subf %73, %162 : vector<2x32xf32>
    %164 = arith.mulf %163, %163 : vector<2x32xf32>
    %cst_114 = arith.constant dense<0.000000e+00> : vector<2xf32>
    %165 = vector.multi_reduction <add>, %164, %cst_114 [1] : vector<2x32xf32> to vector<2xf32>
    %166 = vector.shape_cast %165 : vector<2xf32> to vector<2x1xf32>
    %cst_115 = arith.constant 1.000000e+00 : f32
    %167 = vector.broadcast %cst_115 : f32 to vector<2x1xf32>
    %168 = arith.addf %167, %166 : vector<2x1xf32>
    %cst_116 = arith.constant 1.000000e+00 : f32
    %169 = vector.broadcast %cst_116 : f32 to vector<2x1xf32>
    %170 = arith.divf %169, %168 : vector<2x1xf32>
    %c0_117 = arith.constant 0 : index
    %c1_118 = arith.constant 1 : index
    %171 = vector.load %arg18[%c0_117, %c1_118] : memref<2x4xf32, #tpu.memory_space<vmem>>, vector<2x1xf32>
    tpu.vector_store %arg18[%c0_117, %c1_118], %170 {strides = array<i32>} : memref<2x4xf32, #tpu.memory_space<vmem>>, vector<2x1xf32>,
    %172 = vector.extract_strided_slice %149 {offsets = [2, 0], sizes = [1, 32], strides = [1, 1]} : vector<4x32xf32> to vector<1x32xf32>
    %173 = vector.broadcast %172 : vector<1x32xf32> to vector<2x32xf32>
    %174 = arith.subf %73, %173 : vector<2x32xf32>
    %175 = arith.mulf %174, %174 : vector<2x32xf32>
    %cst_119 = arith.constant dense<0.000000e+00> : vector<2xf32>
    %176 = vector.multi_reduction <add>, %175, %cst_119 [1] : vector<2x32xf32> to vector<2xf32>
    %177 = vector.shape_cast %176 : vector<2xf32> to vector<2x1xf32>
    %cst_120 = arith.constant 1.000000e+00 : f32
    %178 = vector.broadcast %cst_120 : f32 to vector<2x1xf32>
    %179 = arith.addf %178, %177 : vector<2x1xf32>
    %cst_121 = arith.constant 1.000000e+00 : f32
    %180 = vector.broadcast %cst_121 : f32 to vector<2x1xf32>
    %181 = arith.divf %180, %179 : vector<2x1xf32>
    %c0_122 = arith.constant 0 : index
    %c2_123 = arith.constant 2 : index
    %182 = vector.load %arg18[%c0_122, %c2_123] : memref<2x4xf32, #tpu.memory_space<vmem>>, vector<2x1xf32>
    tpu.vector_store %arg18[%c0_122, %c2_123], %181 {strides = array<i32>} : memref<2x4xf32, #tpu.memory_space<vmem>>, vector<2x1xf32>,
    %183 = vector.extract_strided_slice %149 {offsets = [3, 0], sizes = [1, 32], strides = [1, 1]} : vector<4x32xf32> to vector<1x32xf32>
    %184 = vector.broadcast %183 : vector<1x32xf32> to vector<2x32xf32>
    %185 = arith.subf %73, %184 : vector<2x32xf32>
    %186 = arith.mulf %185, %185 : vector<2x32xf32>
    %cst_124 = arith.constant dense<0.000000e+00> : vector<2xf32>
    %187 = vector.multi_reduction <add>, %186, %cst_124 [1] : vector<2x32xf32> to vector<2xf32>
    %188 = vector.shape_cast %187 : vector<2xf32> to vector<2x1xf32>
    %cst_125 = arith.constant 1.000000e+00 : f32
    %189 = vector.broadcast %cst_125 : f32 to vector<2x1xf32>
    %190 = arith.addf %189, %188 : vector<2x1xf32>
    %cst_126 = arith.constant 1.000000e+00 : f32
    %191 = vector.broadcast %cst_126 : f32 to vector<2x1xf32>
    %192 = arith.divf %191, %190 : vector<2x1xf32>
    %c0_127 = arith.constant 0 : index
    %c3_128 = arith.constant 3 : index
    %193 = vector.load %arg18[%c0_127, %c3_128] : memref<2x4xf32, #tpu.memory_space<vmem>>, vector<2x1xf32>
    tpu.vector_store %arg18[%c0_127, %c3_128], %192 {strides = array<i32>} : memref<2x4xf32, #tpu.memory_space<vmem>>, vector<2x1xf32>,
    %c0_129 = arith.constant 0 : index
    %c0_130 = arith.constant 0 : index
    %194 = vector.load %arg18[%c0_129, %c0_130] : memref<2x4xf32, #tpu.memory_space<vmem>>, vector<2x4xf32>
    %cst_131 = arith.constant dense<0.000000e+00> : vector<2xf32>
    %195 = vector.multi_reduction <add>, %194, %cst_131 [1] : vector<2x4xf32> to vector<2xf32>
    %196 = vector.shape_cast %195 : vector<2xf32> to vector<2x1xf32>
    %197 = vector.broadcast %196 : vector<2x1xf32> to vector<2x4xf32>
    %198 = arith.divf %194, %197 : vector<2x4xf32>
    %c0_132 = arith.constant 0 : index
    %c0_133 = arith.constant 0 : index
    %199 = vector.load %arg18[%c0_132, %c0_133] : memref<2x4xf32, #tpu.memory_space<vmem>>, vector<2x4xf32>
    tpu.vector_store %arg18[%c0_132, %c0_133], %198 {strides = array<i32>} : memref<2x4xf32, #tpu.memory_space<vmem>>, vector<2x4xf32>,
    return
  }
}

</mosaic_0001>

<llo_original>
// kernel: csa_rp_forward.1
$region0: #{csa_rp_forward.1}
  #allocation0 [shape = 'u32[]', space=smem, size = 0x4, offset = 0x4, fixed_abs, tag = 'smem constant byte address 0x4 - core index']
  #allocation1 [shape = 'u32[144,128]{1,0:T(1,128)}', space=vmem, size = 0x12000, scoped, tag = 'internal scratch']
  #allocation2 [shape = 'f32[8,128]{1,0:T(8,128)}', space=vmem, size = 0x1000, scoped, tag = 'scratch operand']
  %s0 = inlined_call_operand.vmem [shape: f32[32,64], index: 0, kind: input, shape index: {}]
  %s1 = inlined_call_operand.vmem [shape: bf16[48,32], index: 1, kind: input, shape index: {}]
  %s2 = inlined_call_operand.vmem [shape: bf16[192,128], index: 2, kind: input, shape index: {}]
  %s3 = inlined_call_operand.vmem [shape: f32[1,128], index: 3, kind: input, shape index: {}]
  %s4 = inlined_call_operand.vmem [shape: bf16[24,16], index: 4, kind: input, shape index: {}]
  %s5 = inlined_call_operand.vmem [shape: bf16[384,128], index: 5, kind: input, shape index: {}]
  %s6 = inlined_call_operand.vmem [shape: f32[1,128], index: 6, kind: input, shape index: {}]
  %s7 = inlined_call_operand.vmem [shape: bf16[32,512], index: 7, kind: input, shape index: {}]
  %s8 = inlined_call_operand.vmem [shape: f32[1,512], index: 8, kind: input, shape index: {}]
  %s9 = inlined_call_operand.vmem [shape: bf16[48,8], index: 9, kind: input, shape index: {}]
  %s10 = inlined_call_operand.vmem [shape: bf16[384,128], index: 10, kind: input, shape index: {}]
  %s11 = inlined_call_operand.vmem [shape: f32[1,128], index: 11, kind: input, shape index: {}]
  %s12 = inlined_call_operand.vmem [shape: bf16[96,16], index: 12, kind: input, shape index: {}]
  %s13 = inlined_call_operand.vmem [shape: bf16[384,64], index: 13, kind: input, shape index: {}]
  %s14 = inlined_call_operand.vmem [shape: f32[1,64], index: 14, kind: input, shape index: {}]
  %s15 = inlined_call_operand.vmem [shape: f32[4,32], index: 15, kind: input, shape index: {}]
  %s16 = inlined_call_operand.vmem [shape: f32[32,64], index: 16, kind: output, shape index: {0}]
  %s17 = inlined_call_operand.hbm [shape: f32[2,32], index: 17, kind: output, shape index: {1}]
  %s18 = inlined_call_operand.hbm [shape: f32[2,4], index: 18, kind: output, shape index: {2}]
  %19 = xla_tuple %s16, %s17, %s18
  %s20 = sld [smem:[#allocation0]]
  $region90: #{csa_rp_forward.1} parent=0
    _
  %s22 = ssub.s32 1, %s20
  %s23 = scalar_select 0, %s22, %s20
  $region1: #{csa_rp_forward.1} parent=0
    #allocation3 [shape = 'u8[1024]{0}', space=vmem, size = 0x400, scoped, tag = 'output window, operand 1, single buffered']
    #allocation4 [shape = 's32[1]{0}', space=sflag, size = 0x4, scoped, tag = 'scoped memory for csa_rp_forward.1']
    #allocation5 [shape = 'u8[1024]{0}', space=vmem, size = 0x400, scoped, tag = 'output window, operand 2, single buffered']
    #allocation6 [shape = 's32[1]{0}', space=sflag, size = 0x4, scoped, tag = 'scoped memory for csa_rp_forward.1']
    %24 = vsyncpa [#allocation4], 0
    %25 = vsyncpa [#allocation6], 0
    // Predicated region
    $region2: #{csa_rp_forward.1} parent=1 // pred_check
      _
    $region3: #{csa_rp_forward.1} parent=1 // pred_check_branch
      %27 = sbr.rel (0) target = $region5
    $region4: #{csa_rp_forward.1} parent=1 // pred_region
      _
    $region5: #{csa_rp_forward.1} parent=1 // pred_fallthru
      _
    // Predicated region
    $region6: #{csa_rp_forward.1} parent=1 // pred_check
      _
    $region7: #{csa_rp_forward.1} parent=1 // pred_check_branch
      %29 = sbr.rel (0) target = $region9
    $region8: #{csa_rp_forward.1} parent=1 // pred_region
      _
    $region9: #{csa_rp_forward.1} parent=1 // pred_fallthru
      _
    // Predicated region
    $region10: #{csa_rp_forward.1} parent=1 // pred_check
      _
    $region11: #{csa_rp_forward.1} parent=1 // pred_check_branch
      %31 = sbr.rel (0) target = $region13
    $region12: #{csa_rp_forward.1} parent=1 // pred_region
      _
    $region13: #{csa_rp_forward.1} parent=1 // pred_fallthru
      _
    // Predicated region
    $region14: #{csa_rp_forward.1} parent=1 // pred_check
      _
    $region15: #{csa_rp_forward.1} parent=1 // pred_check_branch
      %33 = sbr.rel (0) target = $region17
    $region16: #{csa_rp_forward.1} parent=1 // pred_region
      _
    $region17: #{csa_rp_forward.1} parent=1 // pred_fallthru
      _
    // Predicated region
    $region18: #{csa_rp_forward.1} parent=1 // pred_check
      _
    $region19: #{csa_rp_forward.1} parent=1 // pred_check_branch
      %35 = sbr.rel (0) target = $region21
    $region20: #{csa_rp_forward.1} parent=1 // pred_region
      _
    $region21: #{csa_rp_forward.1} parent=1 // pred_fallthru
      _
    // Predicated region
    $region22: #{csa_rp_forward.1} parent=1 // pred_check
      _
    $region23: #{csa_rp_forward.1} parent=1 // pred_check_branch
      %37 = sbr.rel (0) target = $region25
    $region24: #{csa_rp_forward.1} parent=1 // pred_region
      _
    $region25: #{csa_rp_forward.1} parent=1 // pred_fallthru
      _
    // Predicated region
    $region26: #{csa_rp_forward.1} parent=1 // pred_check
      _
    $region27: #{csa_rp_forward.1} parent=1 // pred_check_branch
      %39 = sbr.rel (0) target = $region29
    $region28: #{csa_rp_forward.1} parent=1 // pred_region
      _
    $region29: #{csa_rp_forward.1} parent=1 // pred_fallthru
      _
    // Predicated region
    $region30: #{csa_rp_forward.1} parent=1 // pred_check
      _
    $region31: #{csa_rp_forward.1} parent=1 // pred_check_branch
      %41 = sbr.rel (0) target = $region33
    $region32: #{csa_rp_forward.1} parent=1 // pred_region
      _
    $region33: #{csa_rp_forward.1} parent=1 // pred_fallthru
      _
    // Predicated region
    $region34: #{csa_rp_forward.1} parent=1 // pred_check
      _
    $region35: #{csa_rp_forward.1} parent=1 // pred_check_branch
      %43 = sbr.rel (0) target = $region37
    $region36: #{csa_rp_forward.1} parent=1 // pred_region
      _
    $region37: #{csa_rp_forward.1} parent=1 // pred_fallthru
      _
    // Predicated region
    $region38: #{csa_rp_forward.1} parent=1 // pred_check
      _
    $region39: #{csa_rp_forward.1} parent=1 // pred_check_branch
      %45 = sbr.rel (0) target = $region41
    $region40: #{csa_rp_forward.1} parent=1 // pred_region
      _
    $region41: #{csa_rp_forward.1} parent=1 // pred_fallthru
      _
    // Predicated region
    $region42: #{csa_rp_forward.1} parent=1 // pred_check
      _
    $region43: #{csa_rp_forward.1} parent=1 // pred_check_branch
      %47 = sbr.rel (0) target = $region45
    $region44: #{csa_rp_forward.1} parent=1 // pred_region
      _
    $region45: #{csa_rp_forward.1} parent=1 // pred_fallthru
      _
    // Predicated region
    $region46: #{csa_rp_forward.1} parent=1 // pred_check
      _
    $region47: #{csa_rp_forward.1} parent=1 // pred_check_branch
      %49 = sbr.rel (0) target = $region49
    $region48: #{csa_rp_forward.1} parent=1 // pred_region
      _
    $region49: #{csa_rp_forward.1} parent=1 // pred_fallthru
      _
    // Predicated region
    $region50: #{csa_rp_forward.1} parent=1 // pred_check
      _
    $region51: #{csa_rp_forward.1} parent=1 // pred_check_branch
      %51 = sbr.rel (0) target = $region53
    $region52: #{csa_rp_forward.1} parent=1 // pred_region
      _
    $region53: #{csa_rp_forward.1} parent=1 // pred_fallthru
      _
    // Predicated region
    $region54: #{csa_rp_forward.1} parent=1 // pred_check
      _
    $region55: #{csa_rp_forward.1} parent=1 // pred_check_branch
      %53 = sbr.rel (0) target = $region57
    $region56: #{csa_rp_forward.1} parent=1 // pred_region
      _
    $region57: #{csa_rp_forward.1} parent=1 // pred_fallthru
      _
    // Predicated region
    $region58: #{csa_rp_forward.1} parent=1 // pred_check
      _
    $region59: #{csa_rp_forward.1} parent=1 // pred_check_branch
      %55 = sbr.rel (0) target = $region61
    $region60: #{csa_rp_forward.1} parent=1 // pred_region
      _
    $region61: #{csa_rp_forward.1} parent=1 // pred_fallthru
      _
    // Predicated region
    $region62: #{csa_rp_forward.1} parent=1 // pred_check
      _
    $region63: #{csa_rp_forward.1} parent=1 // pred_check_branch
      %57 = sbr.rel (0) target = $region65
    $region64: #{csa_rp_forward.1} parent=1 // pred_region
      _
    $region65: #{csa_rp_forward.1} parent=1 // pred_fallthru
      _
    %v59 = vld [vmem:[%s0] sm:$0xff]
    %v60 = vld [vmem:[%s0 + $0x8] sm:$0xff]
    %v61 = vld [vmem:[%s0 + $0x10] sm:$0xff]
    %v62 = vld [vmem:[%s0 + $0x18] sm:$0xff]
    %v63 = vpack.c.bf16 %v60, %v59
    %v64 = vpack.c.bf16 %v62, %v61
    %v65 = vld [vmem:[%s1] sm:$0xf]
    %v66 = vld [vmem:[%s1 + $0x4] sm:$0xf]
    %v67 = vld [vmem:[%s2] sm:$0xf]
    %v68 = vld [vmem:[%s2 + $0x4] sm:$0xf]
    %v69 = vld [vmem:[%s2 + $0x8] sm:$0xf]
    %v70 = vld [vmem:[%s2 + $0xc] sm:$0xf]
    %v71 = vld [vmem:[%s2 + $0x10] sm:$0xf]
    %v72 = vld [vmem:[%s2 + $0x14] sm:$0xf]
    %v73 = vld [vmem:[%s2 + $0x18] sm:$0xf]
    %v74 = vld [vmem:[%s2 + $0x1c] sm:$0xf]
    %v77 = vunpack.c.l.b16 %v65
    %v78 = vunpack.c.l.b16 %v66
    %v79 = vpack.c.b16 %v78, %v77
    %vm80 = vcmask 261120
    %v82 = vsel %vm80, %v79, 0
    %84 = vmatprep.subr.bf16.mxu0 0
    %85 = vmatpush1.bf16.msra.mxu0 0
    %86 = vmatprep.subr.bf16.mxu0 0
    %87 = vmatpush1.bf16.msra.mxu0 0
    %88 = vmatprep.subr.bf16.mxu0 0
    %89 = vmatpush1.bf16.msra.mxu0 0
    %90 = vmatprep.subr.bf16.mxu0 0
    %91 = vmatpush1.bf16.msra.mxu0 0
    %92 = vmatprep.subr.bf16.mxu0 0
    %93 = vmatpush1.bf16.msra.mxu0 0
    %94 = vmatprep.subr.bf16.mxu0 0
    %95 = vmatpush1.bf16.msra.mxu0 0
    %96 = vmatprep.subr.bf16.mxu0 0
    %97 = vmatpush1.bf16.msra.mxu0 %v64
    %98 = vmatprep.subr.bf16.mxu0 0
    %99 = vmatpush1.bf16.msra.mxu0 %v63
    %100 = vmatprep.subr.bf16.mxu0 0
    %101 = vmatpush2.bf16.msra.mxu0 0
    %102 = vmatprep.subr.bf16.mxu0 0
    %103 = vmatpush2.bf16.msra.mxu0 0
    %104 = vmatprep.subr.bf16.mxu0 0
    %105 = vmatpush2.bf16.msra.mxu0 0
    %106 = vmatprep.subr.bf16.mxu0 0
    %107 = vmatpush2.bf16.msra.mxu0 0
    %108 = vmatprep.subr.bf16.mxu0 0
    %109 = vmatpush2.bf16.msra.mxu0 0
    %110 = vmatprep.subr.bf16.mxu0 0
    %111 = vmatpush2.bf16.msra.mxu0 0
    %112 = vmatprep.subr.bf16.mxu0 0
    %113 = vmatpush2.bf16.msra.mxu0 0
    %114 = vmatprep.subr.bf16.mxu0 0
    %115 = vmatpush2.bf16.msra.mxu0 0
    %116 = vmatprep.mubr.bf16.mxu0 0
    %117 = vmatmul.mubr.bf16.gmra.mxu0 %v82
    %v118 = vpop.f32.mrf.mxu0
    %v119 = vadd.f32 0.0, %v118
    %v120 = vpop.f32.mrf.mxu0
    %v121 = vpop.f32.mrf.mxu0
    %v122 = vadd.f32 0.0, %v121
    %v123 = vpop.f32.mrf.mxu0
    %124 = vdwg.mxu0
    %v125 = vpack.c.bf16 %v122, %v119
    %v126 = vld [vmem:[%s1 + $0x8] sm:$0xf]
    %v127 = vld [vmem:[%s1 + $0xc] sm:$0xf]
    %v128 = vld [vmem:[%s2 + $0x20] sm:$0xf]
    %v129 = vld [vmem:[%s2 + $0x24] sm:$0xf]
    %v130 = vld [vmem:[%s2 + $0x28] sm:$0xf]
    %v131 = vld [vmem:[%s2 + $0x2c] sm:$0xf]
    %v132 = vld [vmem:[%s2 + $0x30] sm:$0xf]
    %v133 = vld [vmem:[%s2 + $0x34] sm:$0xf]
    %v134 = vld [vmem:[%s2 + $0x38] sm:$0xf]
    %v135 = vld [vmem:[%s2 + $0x3c] sm:$0xf]
    %v138 = vunpack.c.l.b16 %v126
    %v139 = vunpack.c.l.b16 %v127
    %v140 = vpack.c.b16 %v139, %v138
    %v142 = vsel %vm80, %v140, 0
    %144 = vmatprep.subr.bf16.mxu0 0
    %145 = vmatpush1.bf16.msra.mxu0 0
    %146 = vmatprep.subr.bf16.mxu0 0
    %147 = vmatpush1.bf16.msra.mxu0 0
    %148 = vmatprep.subr.bf16.mxu0 0
    %149 = vmatpush1.bf16.msra.mxu0 0
    %150 = vmatprep.subr.bf16.mxu0 0
    %151 = vmatpush1.bf16.msra.mxu0 0
    %152 = vmatprep.subr.bf16.mxu0 0
    %153 = vmatpush1.bf16.msra.mxu0 0
    %154 = vmatprep.subr.bf16.mxu0 0
    %155 = vmatpush1.bf16.msra.mxu0 0
    %156 = vmatprep.subr.bf16.mxu0 0
    %157 = vmatpush1.bf16.msra.mxu0 %v64
    %158 = vmatprep.subr.bf16.mxu0 0
    %159 = vmatpush1.bf16.msra.mxu0 %v63
    %160 = vmatprep.subr.bf16.mxu0 0
    %161 = vmatpush2.bf16.msra.mxu0 0
    %162 = vmatprep.subr.bf16.mxu0 0
    %163 = vmatpush2.bf16.msra.mxu0 0
    %164 = vmatprep.subr.bf16.mxu0 0
    %165 = vmatpush2.bf16.msra.mxu0 0
    %166 = vmatprep.subr.bf16.mxu0 0
    %167 = vmatpush2.bf16.msra.mxu0 0
    %168 = vmatprep.subr.bf16.mxu0 0
    %169 = vmatpush2.bf16.msra.mxu0 0
    %170 = vmatprep.subr.bf16.mxu0 0
    %171 = vmatpush2.bf16.msra.mxu0 0
    %172 = vmatprep.subr.bf16.mxu0 0
    %173 = vmatpush2.bf16.msra.mxu0 0
    %174 = vmatprep.subr.bf16.mxu0 0
    %175 = vmatpush2.bf16.msra.mxu0 0
    %176 = vmatprep.mubr.bf16.mxu0 0
    %177 = vmatmul.mubr.bf16.gmra.mxu0 %v142
    %v178 = vpop.f32.mrf.mxu0
    %v179 = vadd.f32 0.0, %v178
    %v180 = vpop.f32.mrf.mxu0
    %v181 = vpop.f32.mrf.mxu0
    %v182 = vadd.f32 0.0, %v181
    %v183 = vpop.f32.mrf.mxu0
    %184 = vdwg.mxu0
    %v185 = vpack.c.bf16 %v182, %v179
    %v194 = vunpack.c.l.b16 %v128
    %v195 = vunpack.c.l.b16 %v129
    %v196 = vunpack.c.l.b16 %v130
    %v197 = vunpack.c.l.b16 %v131
    %v198 = vunpack.c.l.b16 %v132
    %v199 = vunpack.c.l.b16 %v133
    %v200 = vunpack.c.l.b16 %v134
    %v201 = vunpack.c.l.b16 %v135
    %v202 = vpack.c.b16 %v195, %v194
    %v203 = vpack.c.b16 %v197, %v196
    %v204 = vpack.c.b16 %v199, %v198
    %v205 = vpack.c.b16 %v201, %v200
    %vm210 = vcmask 523264
    %v212 = vsel %vm210, %v185, 0
    %214 = vmatprep.subr.bf16.mxu0 0
    %215 = vmatpush1.bf16.msra.mxu0 0
    %216 = vmatprep.subr.bf16.mxu0 0
    %217 = vmatpush1.bf16.msra.mxu0 0
    %218 = vmatprep.subr.bf16.mxu0 0
    %219 = vmatpush1.bf16.msra.mxu0 0
    %220 = vmatprep.subr.bf16.mxu0 0
    %221 = vmatpush1.bf16.msra.mxu0 0
    %222 = vmatprep.subr.bf16.mxu0 0
    %223 = vmatpush1.bf16.msra.mxu0 %v205
    %224 = vmatprep.subr.bf16.mxu0 0
    %225 = vmatpush1.bf16.msra.mxu0 %v204
    %226 = vmatprep.subr.bf16.mxu0 0
    %227 = vmatpush1.bf16.msra.mxu0 %v203
    %228 = vmatprep.subr.bf16.mxu0 0
    %229 = vmatpush1.bf16.msra.mxu0 %v202
    %230 = vmatprep.subr.bf16.mxu0 0
    %231 = vmatpush2.bf16.msra.mxu0 0
    %232 = vmatprep.subr.bf16.mxu0 0
    %233 = vmatpush2.bf16.msra.mxu0 0
    %234 = vmatprep.subr.bf16.mxu0 0
    %235 = vmatpush2.bf16.msra.mxu0 0
    %236 = vmatprep.subr.bf16.mxu0 0
    %237 = vmatpush2.bf16.msra.mxu0 0
    %238 = vmatprep.subr.bf16.mxu0 0
    %239 = vmatpush2.bf16.msra.mxu0 0
    %240 = vmatprep.subr.bf16.mxu0 0
    %241 = vmatpush2.bf16.msra.mxu0 0
    %242 = vmatprep.subr.bf16.mxu0 0
    %243 = vmatpush2.bf16.msra.mxu0 0
    %244 = vmatprep.subr.bf16.mxu0 0
    %245 = vmatpush2.bf16.msra.mxu0 0
    %246 = vmatprep.mubr.bf16.mxu0 0
    %247 = vmatmul.mubr.bf16.gmra.mxu0 %v212
    %v248 = vpop.f32.mrf.mxu0
    %v249 = vadd.f32 0.0, %v248
    %v250 = vpop.f32.mrf.mxu0
    %v251 = vpop.f32.mrf.mxu0
    %v252 = vadd.f32 0.0, %v251
    %v253 = vpop.f32.mrf.mxu0
    %254 = vdwg.mxu0
    %v263 = vunpack.c.l.b16 %v67
    %v264 = vunpack.c.l.b16 %v68
    %v265 = vunpack.c.l.b16 %v69
    %v266 = vunpack.c.l.b16 %v70
    %v267 = vunpack.c.l.b16 %v71
    %v268 = vunpack.c.l.b16 %v72
    %v269 = vunpack.c.l.b16 %v73
    %v270 = vunpack.c.l.b16 %v74
    %v271 = vpack.c.b16 %v264, %v263
    %v272 = vpack.c.b16 %v266, %v265
    %v273 = vpack.c.b16 %v268, %v267
    %v274 = vpack.c.b16 %v270, %v269
    %v280 = vsel %vm210, %v125, 0
    %282 = vmatprep.subr.bf16.mxu0 0
    %283 = vmatpush1.bf16.msra.mxu0 0
    %284 = vmatprep.subr.bf16.mxu0 0
    %285 = vmatpush1.bf16.msra.mxu0 0
    %286 = vmatprep.subr.bf16.mxu0 0
    %287 = vmatpush1.bf16.msra.mxu0 0
    %288 = vmatprep.subr.bf16.mxu0 0
    %289 = vmatpush1.bf16.msra.mxu0 0
    %290 = vmatprep.subr.bf16.mxu0 0
    %291 = vmatpush1.bf16.msra.mxu0 %v274
    %292 = vmatprep.subr.bf16.mxu0 0
    %293 = vmatpush1.bf16.msra.mxu0 %v273
    %294 = vmatprep.subr.bf16.mxu0 0
    %295 = vmatpush1.bf16.msra.mxu0 %v272
    %296 = vmatprep.subr.bf16.mxu0 0
    %297 = vmatpush1.bf16.msra.mxu0 %v271
    %298 = vmatprep.subr.bf16.mxu0 0
    %299 = vmatpush2.bf16.msra.mxu0 0
    %300 = vmatprep.subr.bf16.mxu0 0
    %301 = vmatpush2.bf16.msra.mxu0 0
    %302 = vmatprep.subr.bf16.mxu0 0
    %303 = vmatpush2.bf16.msra.mxu0 0
    %304 = vmatprep.subr.bf16.mxu0 0
    %305 = vmatpush2.bf16.msra.mxu0 0
    %306 = vmatprep.subr.bf16.mxu0 0
    %307 = vmatpush2.bf16.msra.mxu0 0
    %308 = vmatprep.subr.bf16.mxu0 0
    %309 = vmatpush2.bf16.msra.mxu0 0
    %310 = vmatprep.subr.bf16.mxu0 0
    %311 = vmatpush2.bf16.msra.mxu0 0
    %312 = vmatprep.subr.bf16.mxu0 0
    %313 = vmatpush2.bf16.msra.mxu0 0
    %314 = vmatprep.mubr.bf16.mxu0 0
    %315 = vmatmul.mubr.bf16.gmra.mxu0 %v280
    %v316 = vpop.f32.mrf.mxu0
    %v317 = vadd.f32 %v249, %v316
    %v318 = vpop.f32.mrf.mxu0
    %v319 = vpop.f32.mrf.mxu0
    %v320 = vadd.f32 %v252, %v319
    %v321 = vpop.f32.mrf.mxu0
    %322 = vdwg.mxu0
    %v323 = vld [vmem:[%s1 + $0x10] sm:$0xf]
    %v324 = vld [vmem:[%s1 + $0x14] sm:$0xf]
    %v325 = vld [vmem:[%s2 + $0x40] sm:$0xf]
    %v326 = vld [vmem:[%s2 + $0x44] sm:$0xf]
    %v327 = vld [vmem:[%s2 + $0x48] sm:$0xf]
    %v328 = vld [vmem:[%s2 + $0x4c] sm:$0xf]
    %v329 = vld [vmem:[%s2 + $0x50] sm:$0xf]
    %v330 = vld [vmem:[%s2 + $0x54] sm:$0xf]
    %v331 = vld [vmem:[%s2 + $0x58] sm:$0xf]
    %v332 = vld [vmem:[%s2 + $0x5c] sm:$0xf]
    %v335 = vunpack.c.l.b16 %v323
    %v336 = vunpack.c.l.b16 %v324
    %v337 = vpack.c.b16 %v336, %v335
    %v339 = vsel %vm80, %v337, 0
    %341 = vmatprep.subr.bf16.mxu0 0
    %342 = vmatpush1.bf16.msra.mxu0 0
    %343 = vmatprep.subr.bf16.mxu0 0
    %344 = vmatpush1.bf16.msra.mxu0 0
    %345 = vmatprep.subr.bf16.mxu0 0
    %346 = vmatpush1.bf16.msra.mxu0 0
    %347 = vmatprep.subr.bf16.mxu0 0
    %348 = vmatpush1.bf16.msra.mxu0 0
    %349 = vmatprep.subr.bf16.mxu0 0
    %350 = vmatpush1.bf16.msra.mxu0 0
    %351 = vmatprep.subr.bf16.mxu0 0
    %352 = vmatpush1.bf16.msra.mxu0 0
    %353 = vmatprep.subr.bf16.mxu0 0
    %354 = vmatpush1.bf16.msra.mxu0 %v64
    %355 = vmatprep.subr.bf16.mxu0 0
    %356 = vmatpush1.bf16.msra.mxu0 %v63
    %357 = vmatprep.subr.bf16.mxu0 0
    %358 = vmatpush2.bf16.msra.mxu0 0
    %359 = vmatprep.subr.bf16.mxu0 0
    %360 = vmatpush2.bf16.msra.mxu0 0
    %361 = vmatprep.subr.bf16.mxu0 0
    %362 = vmatpush2.bf16.msra.mxu0 0
    %363 = vmatprep.subr.bf16.mxu0 0
    %364 = vmatpush2.bf16.msra.mxu0 0
    %365 = vmatprep.subr.bf16.mxu0 0
    %366 = vmatpush2.bf16.msra.mxu0 0
    %367 = vmatprep.subr.bf16.mxu0 0
    %368 = vmatpush2.bf16.msra.mxu0 0
    %369 = vmatprep.subr.bf16.mxu0 0
    %370 = vmatpush2.bf16.msra.mxu0 0
    %371 = vmatprep.subr.bf16.mxu0 0
    %372 = vmatpush2.bf16.msra.mxu0 0
    %373 = vmatprep.mubr.bf16.mxu0 0
    %374 = vmatmul.mubr.bf16.gmra.mxu0 %v339
    %v375 = vpop.f32.mrf.mxu0
    %v376 = vadd.f32 0.0, %v375
    %v377 = vpop.f32.mrf.mxu0
    %v378 = vpop.f32.mrf.mxu0
    %v379 = vadd.f32 0.0, %v378
    %v380 = vpop.f32.mrf.mxu0
    %381 = vdwg.mxu0
    %v382 = vpack.c.bf16 %v379, %v376
    %v391 = vunpack.c.l.b16 %v325
    %v392 = vunpack.c.l.b16 %v326
    %v393 = vunpack.c.l.b16 %v327
    %v394 = vunpack.c.l.b16 %v328
    %v395 = vunpack.c.l.b16 %v329
    %v396 = vunpack.c.l.b16 %v330
    %v397 = vunpack.c.l.b16 %v331
    %v398 = vunpack.c.l.b16 %v332
    %v399 = vpack.c.b16 %v392, %v391
    %v400 = vpack.c.b16 %v394, %v393
    %v401 = vpack.c.b16 %v396, %v395
    %v402 = vpack.c.b16 %v398, %v397
    %v408 = vsel %vm210, %v382, 0
    %410 = vmatprep.subr.bf16.mxu0 0
    %411 = vmatpush1.bf16.msra.mxu0 0
    %412 = vmatprep.subr.bf16.mxu0 0
    %413 = vmatpush1.bf16.msra.mxu0 0
    %414 = vmatprep.subr.bf16.mxu0 0
    %415 = vmatpush1.bf16.msra.mxu0 0
    %416 = vmatprep.subr.bf16.mxu0 0
    %417 = vmatpush1.bf16.msra.mxu0 0
    %418 = vmatprep.subr.bf16.mxu0 0
    %419 = vmatpush1.bf16.msra.mxu0 %v402
    %420 = vmatprep.subr.bf16.mxu0 0
    %421 = vmatpush1.bf16.msra.mxu0 %v401
    %422 = vmatprep.subr.bf16.mxu0 0
    %423 = vmatpush1.bf16.msra.mxu0 %v400
    %424 = vmatprep.subr.bf16.mxu0 0
    %425 = vmatpush1.bf16.msra.mxu0 %v399
    %426 = vmatprep.subr.bf16.mxu0 0
    %427 = vmatpush2.bf16.msra.mxu0 0
    %428 = vmatprep.subr.bf16.mxu0 0
    %429 = vmatpush2.bf16.msra.mxu0 0
    %430 = vmatprep.subr.bf16.mxu0 0
    %431 = vmatpush2.bf16.msra.mxu0 0
    %432 = vmatprep.subr.bf16.mxu0 0
    %433 = vmatpush2.bf16.msra.mxu0 0
    %434 = vmatprep.subr.bf16.mxu0 0
    %435 = vmatpush2.bf16.msra.mxu0 0
    %436 = vmatprep.subr.bf16.mxu0 0
    %437 = vmatpush2.bf16.msra.mxu0 0
    %438 = vmatprep.subr.bf16.mxu0 0
    %439 = vmatpush2.bf16.msra.mxu0 0
    %440 = vmatprep.subr.bf16.mxu0 0
    %441 = vmatpush2.bf16.msra.mxu0 0
    %442 = vmatprep.mubr.bf16.mxu0 0
    %443 = vmatmul.mubr.bf16.gmra.mxu0 %v408
    %v444 = vpop.f32.mrf.mxu0
    %v445 = vadd.f32 0.0, %v444
    %v446 = vpop.f32.mrf.mxu0
    %v447 = vpop.f32.mrf.mxu0
    %v448 = vadd.f32 0.0, %v447
    %v449 = vpop.f32.mrf.mxu0
    %450 = vdwg.mxu0
    %v451 = vadd.f32 %v317, %v445
    %v452 = vadd.f32 %v320, %v448
    %v453 = vld [vmem:[%s3] sm:$0x1]
    %v455 = vlaneseq
    %v456 = vshrl.u32 %v455, 7
    %v457 = vsub.s32 0, %v456
    %v458 = vrot.slane %v453, %v457
    %v460 = vadd.f32 %v451, %v458
    %v461 = vadd.f32 %v452, %v458
    %v462 = vmax.f32 %v460, 0.0
    %v463 = vmax.f32 %v461, 0.0
    %v464 = vpack.c.bf16 %v463, %v462
    %v465 = vld [vmem:[%s4] sm:$0xf]
    %v466 = vld [vmem:[%s5] sm:$0xf]
    %v467 = vld [vmem:[%s5 + $0x4] sm:$0xf]
    %v468 = vld [vmem:[%s5 + $0x8] sm:$0xf]
    %v469 = vld [vmem:[%s5 + $0xc] sm:$0xf]
    %v470 = vld [vmem:[%s5 + $0x10] sm:$0xf]
    %v471 = vld [vmem:[%s5 + $0x14] sm:$0xf]
    %v472 = vld [vmem:[%s5 + $0x18] sm:$0xf]
    %v473 = vld [vmem:[%s5 + $0x1c] sm:$0xf]
    %v474 = vld [vmem:[%s5 + $0x20] sm:$0xf]
    %v475 = vld [vmem:[%s5 + $0x24] sm:$0xf]
    %v476 = vld [vmem:[%s5 + $0x28] sm:$0xf]
    %v477 = vld [vmem:[%s5 + $0x2c] sm:$0xf]
    %v478 = vld [vmem:[%s5 + $0x30] sm:$0xf]
    %v479 = vld [vmem:[%s5 + $0x34] sm:$0xf]
    %v480 = vld [vmem:[%s5 + $0x38] sm:$0xf]
    %v481 = vld [vmem:[%s5 + $0x3c] sm:$0xf]
    %vm482 = vcmask 130048
    %v484 = vsel %vm482, %v465, 0
    %486 = vmatprep.subr.bf16.mxu0 0
    %487 = vmatpush1.bf16.msra.mxu0 0
    %488 = vmatprep.subr.bf16.mxu0 0
    %489 = vmatpush1.bf16.msra.mxu0 0
    %490 = vmatprep.subr.bf16.mxu0 0
    %491 = vmatpush1.bf16.msra.mxu0 0
    %492 = vmatprep.subr.bf16.mxu0 0
    %493 = vmatpush1.bf16.msra.mxu0 0
    %494 = vmatprep.subr.bf16.mxu0 0
    %495 = vmatpush1.bf16.msra.mxu0 0
    %496 = vmatprep.subr.bf16.mxu0 0
    %497 = vmatpush1.bf16.msra.mxu0 0
    %498 = vmatprep.subr.bf16.mxu0 0
    %499 = vmatpush1.bf16.msra.mxu0 0
    %500 = vmatprep.subr.bf16.mxu0 0
    %501 = vmatpush1.bf16.msra.mxu0 %v464
    %502 = vmatprep.subr.bf16.mxu0 0
    %503 = vmatpush2.bf16.msra.mxu0 0
    %504 = vmatprep.subr.bf16.mxu0 0
    %505 = vmatpush2.bf16.msra.mxu0 0
    %506 = vmatprep.subr.bf16.mxu0 0
    %507 = vmatpush2.bf16.msra.mxu0 0
    %508 = vmatprep.subr.bf16.mxu0 0
    %509 = vmatpush2.bf16.msra.mxu0 0
    %510 = vmatprep.subr.bf16.mxu0 0
    %511 = vmatpush2.bf16.msra.mxu0 0
    %512 = vmatprep.subr.bf16.mxu0 0
    %513 = vmatpush2.bf16.msra.mxu0 0
    %514 = vmatprep.subr.bf16.mxu0 0
    %515 = vmatpush2.bf16.msra.mxu0 0
    %516 = vmatprep.subr.bf16.mxu0 0
    %517 = vmatpush2.bf16.msra.mxu0 0
    %518 = vmatprep.mubr.bf16.mxu0 0
    %519 = vmatmul.mubr.bf16.gmra.mxu0 %v484
    %v520 = vpop.f32.mrf.mxu0
    %v521 = vadd.f32 0.0, %v520
    %v522 = vpop.f32.mrf.mxu0
    %v523 = vpop.f32.mrf.mxu0
    %v524 = vpop.f32.mrf.mxu0
    %525 = vdwg.mxu0
    %v526 = vpack.c.bf16 %v521, %v521
    %v527 = vld [vmem:[%s4 + $0x4] sm:$0xf]
    %v528 = vld [vmem:[%s5 + $0x40] sm:$0xf]
    %v529 = vld [vmem:[%s5 + $0x44] sm:$0xf]
    %v530 = vld [vmem:[%s5 + $0x48] sm:$0xf]
    %v531 = vld [vmem:[%s5 + $0x4c] sm:$0xf]
    %v532 = vld [vmem:[%s5 + $0x50] sm:$0xf]
    %v533 = vld [vmem:[%s5 + $0x54] sm:$0xf]
    %v534 = vld [vmem:[%s5 + $0x58] sm:$0xf]
    %v535 = vld [vmem:[%s5 + $0x5c] sm:$0xf]
    %v536 = vld [vmem:[%s5 + $0x60] sm:$0xf]
    %v537 = vld [vmem:[%s5 + $0x64] sm:$0xf]
    %v538 = vld [vmem:[%s5 + $0x68] sm:$0xf]
    %v539 = vld [vmem:[%s5 + $0x6c] sm:$0xf]
    %v540 = vld [vmem:[%s5 + $0x70] sm:$0xf]
    %v541 = vld [vmem:[%s5 + $0x74] sm:$0xf]
    %v542 = vld [vmem:[%s5 + $0x78] sm:$0xf]
    %v543 = vld [vmem:[%s5 + $0x7c] sm:$0xf]
    %v545 = vsel %vm482, %v527, 0
    %547 = vmatprep.subr.bf16.mxu0 0
    %548 = vmatpush1.bf16.msra.mxu0 0
    %549 = vmatprep.subr.bf16.mxu0 0
    %550 = vmatpush1.bf16.msra.mxu0 0
    %551 = vmatprep.subr.bf16.mxu0 0
    %552 = vmatpush1.bf16.msra.mxu0 0
    %553 = vmatprep.subr.bf16.mxu0 0
    %554 = vmatpush1.bf16.msra.mxu0 0
    %555 = vmatprep.subr.bf16.mxu0 0
    %556 = vmatpush1.bf16.msra.mxu0 0
    %557 = vmatprep.subr.bf16.mxu0 0
    %558 = vmatpush1.bf16.msra.mxu0 0
    %559 = vmatprep.subr.bf16.mxu0 0
    %560 = vmatpush1.bf16.msra.mxu0 0
    %561 = vmatprep.subr.bf16.mxu0 0
    %562 = vmatpush1.bf16.msra.mxu0 %v464
    %563 = vmatprep.subr.bf16.mxu0 0
    %564 = vmatpush2.bf16.msra.mxu0 0
    %565 = vmatprep.subr.bf16.mxu0 0
    %566 = vmatpush2.bf16.msra.mxu0 0
    %567 = vmatprep.subr.bf16.mxu0 0
    %568 = vmatpush2.bf16.msra.mxu0 0
    %569 = vmatprep.subr.bf16.mxu0 0
    %570 = vmatpush2.bf16.msra.mxu0 0
    %571 = vmatprep.subr.bf16.mxu0 0
    %572 = vmatpush2.bf16.msra.mxu0 0
    %573 = vmatprep.subr.bf16.mxu0 0
    %574 = vmatpush2.bf16.msra.mxu0 0
    %575 = vmatprep.subr.bf16.mxu0 0
    %576 = vmatpush2.bf16.msra.mxu0 0
    %577 = vmatprep.subr.bf16.mxu0 0
    %578 = vmatpush2.bf16.msra.mxu0 0
    %579 = vmatprep.mubr.bf16.mxu0 0
    %580 = vmatmul.mubr.bf16.gmra.mxu0 %v545
    %v581 = vpop.f32.mrf.mxu0
    %v582 = vadd.f32 0.0, %v581
    %v583 = vpop.f32.mrf.mxu0
    %v584 = vpop.f32.mrf.mxu0
    %v585 = vpop.f32.mrf.mxu0
    %586 = vdwg.mxu0
    %v587 = vpack.c.bf16 %v582, %v582
    %v604 = vunpack.c.l.b16 %v528
    %v605 = vunpack.c.l.b16 %v529
    %v606 = vunpack.c.l.b16 %v530
    %v607 = vunpack.c.l.b16 %v531
    %v608 = vunpack.c.l.b16 %v532
    %v609 = vunpack.c.l.b16 %v533
    %v610 = vunpack.c.l.b16 %v534
    %v611 = vunpack.c.l.b16 %v535
    %v612 = vunpack.c.l.b16 %v536
    %v613 = vunpack.c.l.b16 %v537
    %v614 = vunpack.c.l.b16 %v538
    %v615 = vunpack.c.l.b16 %v539
    %v616 = vunpack.c.l.b16 %v540
    %v617 = vunpack.c.l.b16 %v541
    %v618 = vunpack.c.l.b16 %v542
    %v619 = vunpack.c.l.b16 %v543
    %v620 = vpack.c.b16 %v605, %v604
    %v621 = vpack.c.b16 %v607, %v606
    %v622 = vpack.c.b16 %v609, %v608
    %v623 = vpack.c.b16 %v611, %v610
    %v624 = vpack.c.b16 %v613, %v612
    %v625 = vpack.c.b16 %v615, %v614
    %v626 = vpack.c.b16 %v617, %v616
    %v627 = vpack.c.b16 %v619, %v618
    %636 = vmatprep.subr.bf16.mxu0 0
    %637 = vmatpush1.bf16.msra.mxu0 %v627
    %638 = vmatprep.subr.bf16.mxu0 0
    %639 = vmatpush1.bf16.msra.mxu0 %v626
    %640 = vmatprep.subr.bf16.mxu0 0
    %641 = vmatpush1.bf16.msra.mxu0 %v625
    %642 = vmatprep.subr.bf16.mxu0 0
    %643 = vmatpush1.bf16.msra.mxu0 %v624
    %644 = vmatprep.subr.bf16.mxu0 0
    %645 = vmatpush1.bf16.msra.mxu0 %v623
    %646 = vmatprep.subr.bf16.mxu0 0
    %647 = vmatpush1.bf16.msra.mxu0 %v622
    %648 = vmatprep.subr.bf16.mxu0 0
    %649 = vmatpush1.bf16.msra.mxu0 %v621
    %650 = vmatprep.subr.bf16.mxu0 0
    %651 = vmatpush1.bf16.msra.mxu0 %v620
    %652 = vmatprep.subr.bf16.mxu0 0
    %653 = vmatpush2.bf16.msra.mxu0 0
    %654 = vmatprep.subr.bf16.mxu0 0
    %655 = vmatpush2.bf16.msra.mxu0 0
    %656 = vmatprep.subr.bf16.mxu0 0
    %657 = vmatpush2.bf16.msra.mxu0 0
    %658 = vmatprep.subr.bf16.mxu0 0
    %659 = vmatpush2.bf16.msra.mxu0 0
    %660 = vmatprep.subr.bf16.mxu0 0
    %661 = vmatpush2.bf16.msra.mxu0 0
    %662 = vmatprep.subr.bf16.mxu0 0
    %663 = vmatpush2.bf16.msra.mxu0 0
    %664 = vmatprep.subr.bf16.mxu0 0
    %665 = vmatpush2.bf16.msra.mxu0 0
    %666 = vmatprep.subr.bf16.mxu0 0
    %667 = vmatpush2.bf16.msra.mxu0 0
    %668 = vmatprep.mubr.bf16.mxu0 0
    %669 = vmatmul.mubr.bf16.gmra.mxu0 %v587
    %v670 = vpop.f32.mrf.mxu0
    %v671 = vadd.f32 0.0, %v670
    %v672 = vpop.f32.mrf.mxu0
    %v673 = vpop.f32.mrf.mxu0
    %v674 = vpop.f32.mrf.mxu0
    %675 = vdwg.mxu0
    %v692 = vunpack.c.l.b16 %v466
    %v693 = vunpack.c.l.b16 %v467
    %v694 = vunpack.c.l.b16 %v468
    %v695 = vunpack.c.l.b16 %v469
    %v696 = vunpack.c.l.b16 %v470
    %v697 = vunpack.c.l.b16 %v471
    %v698 = vunpack.c.l.b16 %v472
    %v699 = vunpack.c.l.b16 %v473
    %v700 = vunpack.c.l.b16 %v474
    %v701 = vunpack.c.l.b16 %v475
    %v702 = vunpack.c.l.b16 %v476
    %v703 = vunpack.c.l.b16 %v477
    %v704 = vunpack.c.l.b16 %v478
    %v705 = vunpack.c.l.b16 %v479
    %v706 = vunpack.c.l.b16 %v480
    %v707 = vunpack.c.l.b16 %v481
    %v708 = vpack.c.b16 %v693, %v692
    %v709 = vpack.c.b16 %v695, %v694
    %v710 = vpack.c.b16 %v697, %v696
    %v711 = vpack.c.b16 %v699, %v698
    %v712 = vpack.c.b16 %v701, %v700
    %v713 = vpack.c.b16 %v703, %v702
    %v714 = vpack.c.b16 %v705, %v704
    %v715 = vpack.c.b16 %v707, %v706
    %724 = vmatprep.subr.bf16.mxu0 0
    %725 = vmatpush1.bf16.msra.mxu0 %v715
    %726 = vmatprep.subr.bf16.mxu0 0
    %727 = vmatpush1.bf16.msra.mxu0 %v714
    %728 = vmatprep.subr.bf16.mxu0 0
    %729 = vmatpush1.bf16.msra.mxu0 %v713
    %730 = vmatprep.subr.bf16.mxu0 0
    %731 = vmatpush1.bf16.msra.mxu0 %v712
    %732 = vmatprep.subr.bf16.mxu0 0
    %733 = vmatpush1.bf16.msra.mxu0 %v711
    %734 = vmatprep.subr.bf16.mxu0 0
    %735 = vmatpush1.bf16.msra.mxu0 %v710
    %736 = vmatprep.subr.bf16.mxu0 0
    %737 = vmatpush1.bf16.msra.mxu0 %v709
    %738 = vmatprep.subr.bf16.mxu0 0
    %739 = vmatpush1.bf16.msra.mxu0 %v708
    %740 = vmatprep.subr.bf16.mxu0 0
    %741 = vmatpush2.bf16.msra.mxu0 0
    %742 = vmatprep.subr.bf16.mxu0 0
    %743 = vmatpush2.bf16.msra.mxu0 0
    %744 = vmatprep.subr.bf16.mxu0 0
    %745 = vmatpush2.bf16.msra.mxu0 0
    %746 = vmatprep.subr.bf16.mxu0 0
    %747 = vmatpush2.bf16.msra.mxu0 0
    %748 = vmatprep.subr.bf16.mxu0 0
    %749 = vmatpush2.bf16.msra.mxu0 0
    %750 = vmatprep.subr.bf16.mxu0 0
    %751 = vmatpush2.bf16.msra.mxu0 0
    %752 = vmatprep.subr.bf16.mxu0 0
    %753 = vmatpush2.bf16.msra.mxu0 0
    %754 = vmatprep.subr.bf16.mxu0 0
    %755 = vmatpush2.bf16.msra.mxu0 0
    %756 = vmatprep.mubr.bf16.mxu0 0
    %757 = vmatmul.mubr.bf16.gmra.mxu0 %v526
    %v758 = vpop.f32.mrf.mxu0
    %v759 = vadd.f32 %v671, %v758
    %v760 = vpop.f32.mrf.mxu0
    %v761 = vpop.f32.mrf.mxu0
    %v762 = vpop.f32.mrf.mxu0
    %763 = vdwg.mxu0
    %v764 = vld [vmem:[%s4 + $0x8] sm:$0xf]
    %v765 = vld [vmem:[%s5 + $0x80] sm:$0xf]
    %v766 = vld [vmem:[%s5 + $0x84] sm:$0xf]
    %v767 = vld [vmem:[%s5 + $0x88] sm:$0xf]
    %v768 = vld [vmem:[%s5 + $0x8c] sm:$0xf]
    %v769 = vld [vmem:[%s5 + $0x90] sm:$0xf]
    %v770 = vld [vmem:[%s5 + $0x94] sm:$0xf]
    %v771 = vld [vmem:[%s5 + $0x98] sm:$0xf]
    %v772 = vld [vmem:[%s5 + $0x9c] sm:$0xf]
    %v773 = vld [vmem:[%s5 + $0xa0] sm:$0xf]
    %v774 = vld [vmem:[%s5 + $0xa4] sm:$0xf]
    %v775 = vld [vmem:[%s5 + $0xa8] sm:$0xf]
    %v776 = vld [vmem:[%s5 + $0xac] sm:$0xf]
    %v777 = vld [vmem:[%s5 + $0xb0] sm:$0xf]
    %v778 = vld [vmem:[%s5 + $0xb4] sm:$0xf]
    %v779 = vld [vmem:[%s5 + $0xb8] sm:$0xf]
    %v780 = vld [vmem:[%s5 + $0xbc] sm:$0xf]
    %v782 = vsel %vm482, %v764, 0
    %784 = vmatprep.subr.bf16.mxu0 0
    %785 = vmatpush1.bf16.msra.mxu0 0
    %786 = vmatprep.subr.bf16.mxu0 0
    %787 = vmatpush1.bf16.msra.mxu0 0
    %788 = vmatprep.subr.bf16.mxu0 0
    %789 = vmatpush1.bf16.msra.mxu0 0
    %790 = vmatprep.subr.bf16.mxu0 0
    %791 = vmatpush1.bf16.msra.mxu0 0
    %792 = vmatprep.subr.bf16.mxu0 0
    %793 = vmatpush1.bf16.msra.mxu0 0
    %794 = vmatprep.subr.bf16.mxu0 0
    %795 = vmatpush1.bf16.msra.mxu0 0
    %796 = vmatprep.subr.bf16.mxu0 0
    %797 = vmatpush1.bf16.msra.mxu0 0
    %798 = vmatprep.subr.bf16.mxu0 0
    %799 = vmatpush1.bf16.msra.mxu0 %v464
    %800 = vmatprep.subr.bf16.mxu0 0
    %801 = vmatpush2.bf16.msra.mxu0 0
    %802 = vmatprep.subr.bf16.mxu0 0
    %803 = vmatpush2.bf16.msra.mxu0 0
    %804 = vmatprep.subr.bf16.mxu0 0
    %805 = vmatpush2.bf16.msra.mxu0 0
    %806 = vmatprep.subr.bf16.mxu0 0
    %807 = vmatpush2.bf16.msra.mxu0 0
    %808 = vmatprep.subr.bf16.mxu0 0
    %809 = vmatpush2.bf16.msra.mxu0 0
    %810 = vmatprep.subr.bf16.mxu0 0
    %811 = vmatpush2.bf16.msra.mxu0 0
    %812 = vmatprep.subr.bf16.mxu0 0
    %813 = vmatpush2.bf16.msra.mxu0 0
    %814 = vmatprep.subr.bf16.mxu0 0
    %815 = vmatpush2.bf16.msra.mxu0 0
    %816 = vmatprep.mubr.bf16.mxu0 0
    %817 = vmatmul.mubr.bf16.gmra.mxu0 %v782
    %v818 = vpop.f32.mrf.mxu0
    %v819 = vadd.f32 0.0, %v818
    %v820 = vpop.f32.mrf.mxu0
    %v821 = vpop.f32.mrf.mxu0
    %v822 = vpop.f32.mrf.mxu0
    %823 = vdwg.mxu0
    %v824 = vpack.c.bf16 %v819, %v819
    %v841 = vunpack.c.l.b16 %v765
    %v842 = vunpack.c.l.b16 %v766
    %v843 = vunpack.c.l.b16 %v767
    %v844 = vunpack.c.l.b16 %v768
    %v845 = vunpack.c.l.b16 %v769
    %v846 = vunpack.c.l.b16 %v770
    %v847 = vunpack.c.l.b16 %v771
    %v848 = vunpack.c.l.b16 %v772
    %v849 = vunpack.c.l.b16 %v773
    %v850 = vunpack.c.l.b16 %v774
    %v851 = vunpack.c.l.b16 %v775
    %v852 = vunpack.c.l.b16 %v776
    %v853 = vunpack.c.l.b16 %v777
    %v854 = vunpack.c.l.b16 %v778
    %v855 = vunpack.c.l.b16 %v779
    %v856 = vunpack.c.l.b16 %v780
    %v857 = vpack.c.b16 %v842, %v841
    %v858 = vpack.c.b16 %v844, %v843
    %v859 = vpack.c.b16 %v846, %v845
    %v860 = vpack.c.b16 %v848, %v847
    %v861 = vpack.c.b16 %v850, %v849
    %v862 = vpack.c.b16 %v852, %v851
    %v863 = vpack.c.b16 %v854, %v853
    %v864 = vpack.c.b16 %v856, %v855
    %873 = vmatprep.subr.bf16.mxu0 0
    %874 = vmatpush1.bf16.msra.mxu0 %v864
    %875 = vmatprep.subr.bf16.mxu0 0
    %876 = vmatpush1.bf16.msra.mxu0 %v863
    %877 = vmatprep.subr.bf16.mxu0 0
    %878 = vmatpush1.bf16.msra.mxu0 %v862
    %879 = vmatprep.subr.bf16.mxu0 0
    %880 = vmatpush1.bf16.msra.mxu0 %v861
    %881 = vmatprep.subr.bf16.mxu0 0
    %882 = vmatpush1.bf16.msra.mxu0 %v860
    %883 = vmatprep.subr.bf16.mxu0 0
    %884 = vmatpush1.bf16.msra.mxu0 %v859
    %885 = vmatprep.subr.bf16.mxu0 0
    %886 = vmatpush1.bf16.msra.mxu0 %v858
    %887 = vmatprep.subr.bf16.mxu0 0
    %888 = vmatpush1.bf16.msra.mxu0 %v857
    %889 = vmatprep.subr.bf16.mxu0 0
    %890 = vmatpush2.bf16.msra.mxu0 0
    %891 = vmatprep.subr.bf16.mxu0 0
    %892 = vmatpush2.bf16.msra.mxu0 0
    %893 = vmatprep.subr.bf16.mxu0 0
    %894 = vmatpush2.bf16.msra.mxu0 0
    %895 = vmatprep.subr.bf16.mxu0 0
    %896 = vmatpush2.bf16.msra.mxu0 0
    %897 = vmatprep.subr.bf16.mxu0 0
    %898 = vmatpush2.bf16.msra.mxu0 0
    %899 = vmatprep.subr.bf16.mxu0 0
    %900 = vmatpush2.bf16.msra.mxu0 0
    %901 = vmatprep.subr.bf16.mxu0 0
    %902 = vmatpush2.bf16.msra.mxu0 0
    %903 = vmatprep.subr.bf16.mxu0 0
    %904 = vmatpush2.bf16.msra.mxu0 0
    %905 = vmatprep.mubr.bf16.mxu0 0
    %906 = vmatmul.mubr.bf16.gmra.mxu0 %v824
    %v907 = vpop.f32.mrf.mxu0
    %v908 = vadd.f32 0.0, %v907
    %v909 = vpop.f32.mrf.mxu0
    %v910 = vpop.f32.mrf.mxu0
    %v911 = vpop.f32.mrf.mxu0
    %912 = vdwg.mxu0
    %v913 = vadd.f32 %v759, %v908
    %v914 = vld [vmem:[%s6] sm:$0x1]
    %v916 = vlaneseq
    %v917 = vshrl.u32 %v916, 7
    %v918 = vsub.s32 0, %v917
    %v919 = vrot.slane %v914, %v918
    %v921 = vadd.f32 %v913, %v919
    %v922 = vmax.f32 %v921, 0.0
    %vm923 = vcmask 1043456
    %v924 = vsel %vm923, %v922, 0.0
    %v925 = vrot.slane %v924, 4
    %v926 = vadd.f32 %v924, %v925
    %v927 = vrot.slane %v926, 2
    %v928 = vadd.f32 %v926, %v927
    %v929 = vrot.slane %v928, 1
    %v930 = vadd.f32 %v928, %v929
    %932 = vrot.lane.b32.xlu0 %v930, 96
    %v933 = vpop.permute.xlu0 %932
    %v935 = vadd.f32 %v930, %v933
    %936 = vrot.lane.b32.xlu0 %v930, 64
    %v937 = vpop.permute.xlu0 %936
    %v939 = vadd.f32 %v935, %v937
    %940 = vrot.lane.b32.xlu0 %v930, 32
    %v941 = vpop.permute.xlu0 %940
    %v943 = vadd.f32 %v939, %v941
    %v944 = vmul.f32 %v943, 0.0625
    %vm945 = vcmask 253952
    %946 = vst.msk [vmem:[#allocation3] sm:$0x1] %vm945, %v944
    %v948 = vrot.slane %v922, 4
    %v950 = vsel %vm923, %v948, 0.0
    %v951 = vrot.slane %v950, 4
    %v952 = vadd.f32 %v950, %v951
    %v953 = vrot.slane %v952, 2
    %v954 = vadd.f32 %v952, %v953
    %v955 = vrot.slane %v954, 1
    %v956 = vadd.f32 %v954, %v955
    %958 = vrot.lane.b32.xlu0 %v956, 96
    %v959 = vpop.permute.xlu0 %958
    %v961 = vadd.f32 %v956, %v959
    %962 = vrot.lane.b32.xlu0 %v956, 64
    %v963 = vpop.permute.xlu0 %962
    %v965 = vadd.f32 %v961, %v963
    %966 = vrot.lane.b32.xlu0 %v956, 32
    %v967 = vpop.permute.xlu0 %966
    %v969 = vadd.f32 %v965, %v967
    %v970 = vmul.f32 %v969, 0.0625
    %971 = vst.msk [vmem:[#allocation3 + $0x1] sm:$0x1] %vm945, %v970
    %v972 = vld [vmem:[#allocation3] sm:$0x3]
    %v973 = vpack.c.bf16 %v972, %v972
    %v974 = vld [vmem:[%s7] sm:$0xff]
    %v975 = vld [vmem:[%s7 + $0x8] sm:$0xff]
    %v976 = vld [vmem:[%s7 + $0x10] sm:$0xff]
    %v977 = vld [vmem:[%s7 + $0x18] sm:$0xff]
    %v978 = vld [vmem:[%s7 + $0x20] sm:$0xff]
    %v979 = vld [vmem:[%s7 + $0x28] sm:$0xff]
    %v980 = vld [vmem:[%s7 + $0x30] sm:$0xff]
    %v981 = vld [vmem:[%s7 + $0x38] sm:$0xff]
    %v982 = vld [vmem:[%s8] sm:$0xf]
    %v984 = vlaneseq
    %v985 = vshrl.u32 %v984, 7
    %v986 = vsub.s32 0, %v985
    %v987 = vrot.slane %v982, %v986
    %v988 = vlaneseq
    %v989 = vshrl.u32 %v988, 7
    %v990 = vsub.s32 1, %v989
    %v991 = vrot.slane %v982, %v990
    %v992 = vlaneseq
    %v993 = vshrl.u32 %v992, 7
    %v994 = vsub.s32 2, %v993
    %v995 = vrot.slane %v982, %v994
    %v996 = vlaneseq
    %v997 = vshrl.u32 %v996, 7
    %v998 = vsub.s32 3, %v997
    %v999 = vrot.slane %v982, %v998
    %v1012 = vunpack.c.l.b16 %v974
    %v1013 = vunpack.c.h.b16 %v974
    %v1014 = vunpack.c.l.b16 %v975
    %v1015 = vunpack.c.h.b16 %v975
    %v1016 = vunpack.c.l.b16 %v976
    %v1017 = vunpack.c.h.b16 %v976
    %v1018 = vunpack.c.l.b16 %v977
    %v1019 = vunpack.c.h.b16 %v977
    %v1020 = vunpack.c.l.b16 %v978
    %v1021 = vunpack.c.h.b16 %v978
    %v1022 = vunpack.c.l.b16 %v979
    %v1023 = vunpack.c.h.b16 %v979
    %v1024 = vunpack.c.l.b16 %v980
    %v1025 = vunpack.c.h.b16 %v980
    %v1026 = vunpack.c.l.b16 %v981
    %v1027 = vunpack.c.h.b16 %v981
    %v1028 = vpack.c.b16 %v1016, %v1012
    %v1029 = vpack.c.b16 %v1017, %v1013
    %v1030 = vpack.c.b16 %v1018, %v1014
    %v1031 = vpack.c.b16 %v1019, %v1015
    %v1032 = vpack.c.b16 %v1024, %v1020
    %v1033 = vpack.c.b16 %v1025, %v1021
    %v1034 = vpack.c.b16 %v1026, %v1022
    %v1035 = vpack.c.b16 %v1027, %v1023
    %v1045 = vsel %vm80, %v973, 0
    %1047 = vmatprep.subr.bf16.mxu0 0
    %1048 = vmatpush1.bf16.msra.mxu0 0
    %1049 = vmatprep.subr.bf16.mxu0 0
    %1050 = vmatpush1.bf16.msra.mxu0 0
    %1051 = vmatprep.subr.bf16.mxu0 0
    %1052 = vmatpush1.bf16.msra.mxu0 0
    %1053 = vmatprep.subr.bf16.mxu0 0
    %1054 = vmatpush1.bf16.msra.mxu0 0
    %1055 = vmatprep.subr.bf16.mxu0 0
    %1056 = vmatpush1.bf16.msra.mxu0 0
    %1057 = vmatprep.subr.bf16.mxu0 0
    %1058 = vmatpush1.bf16.msra.mxu0 0
    %1059 = vmatprep.subr.bf16.mxu0 %v1033
    %1060 = vmatpush1.bf16.msra.mxu0 %v1032
    %1061 = vmatprep.subr.bf16.mxu0 %v1029
    %1062 = vmatpush1.bf16.msra.mxu0 %v1028
    %1063 = vmatprep.subr.bf16.mxu0 0
    %1064 = vmatpush2.bf16.msra.mxu0 0
    %1065 = vmatprep.subr.bf16.mxu0 0
    %1066 = vmatpush2.bf16.msra.mxu0 0
    %1067 = vmatprep.subr.bf16.mxu0 0
    %1068 = vmatpush2.bf16.msra.mxu0 0
    %1069 = vmatprep.subr.bf16.mxu0 0
    %1070 = vmatpush2.bf16.msra.mxu0 0
    %1071 = vmatprep.subr.bf16.mxu0 0
    %1072 = vmatpush2.bf16.msra.mxu0 0
    %1073 = vmatprep.subr.bf16.mxu0 0
    %1074 = vmatpush2.bf16.msra.mxu0 0
    %1075 = vmatprep.subr.bf16.mxu0 0
    %1076 = vmatpush2.bf16.msra.mxu0 0
    %1077 = vmatprep.subr.bf16.mxu0 0
    %1078 = vmatpush2.bf16.msra.mxu0 0
    %1079 = vmatprep.mubr.bf16.mxu0 0
    %1080 = vmatmul.mubr.bf16.gmra.mxu0 %v1045
    %v1081 = vpop.f32.mrf.mxu0
    %v1082 = vadd.f32 %v987, %v1081
    %v1083 = vpop.f32.mrf.mxu0
    %v1084 = vadd.f32 %v991, %v1083
    %v1085 = vpop.f32.mrf.mxu0
    %v1086 = vpop.f32.mrf.mxu0
    %1087 = vdwg.mxu0
    %1088 = vmatprep.subr.bf16.mxu0 0
    %1089 = vmatpush1.bf16.msra.mxu0 0
    %1090 = vmatprep.subr.bf16.mxu0 0
    %1091 = vmatpush1.bf16.msra.mxu0 0
    %1092 = vmatprep.subr.bf16.mxu0 0
    %1093 = vmatpush1.bf16.msra.mxu0 0
    %1094 = vmatprep.subr.bf16.mxu0 0
    %1095 = vmatpush1.bf16.msra.mxu0 0
    %1096 = vmatprep.subr.bf16.mxu0 0
    %1097 = vmatpush1.bf16.msra.mxu0 0
    %1098 = vmatprep.subr.bf16.mxu0 0
    %1099 = vmatpush1.bf16.msra.mxu0 0
    %1100 = vmatprep.subr.bf16.mxu0 %v1035
    %1101 = vmatpush1.bf16.msra.mxu0 %v1034
    %1102 = vmatprep.subr.bf16.mxu0 %v1031
    %1103 = vmatpush1.bf16.msra.mxu0 %v1030
    %1104 = vmatprep.subr.bf16.mxu0 0
    %1105 = vmatpush2.bf16.msra.mxu0 0
    %1106 = vmatprep.subr.bf16.mxu0 0
    %1107 = vmatpush2.bf16.msra.mxu0 0
    %1108 = vmatprep.subr.bf16.mxu0 0
    %1109 = vmatpush2.bf16.msra.mxu0 0
    %1110 = vmatprep.subr.bf16.mxu0 0
    %1111 = vmatpush2.bf16.msra.mxu0 0
    %1112 = vmatprep.subr.bf16.mxu0 0
    %1113 = vmatpush2.bf16.msra.mxu0 0
    %1114 = vmatprep.subr.bf16.mxu0 0
    %1115 = vmatpush2.bf16.msra.mxu0 0
    %1116 = vmatprep.subr.bf16.mxu0 0
    %1117 = vmatpush2.bf16.msra.mxu0 0
    %1118 = vmatprep.subr.bf16.mxu0 0
    %1119 = vmatpush2.bf16.msra.mxu0 0
    %1120 = vmatprep.mubr.bf16.mxu0 0
    %1121 = vmatmul.mubr.bf16.gmra.mxu0 %v1045
    %v1122 = vpop.f32.mrf.mxu0
    %v1123 = vadd.f32 %v995, %v1122
    %v1124 = vpop.f32.mrf.mxu0
    %v1125 = vadd.f32 %v999, %v1124
    %v1126 = vpop.f32.mrf.mxu0
    %v1127 = vpop.f32.mrf.mxu0
    %1128 = vdwg.mxu0
    %v1129 = vmax.f32 %v1082, 0.0
    %v1130 = vmax.f32 %v1084, 0.0
    %v1131 = vmax.f32 %v1123, 0.0
    %v1132 = vmax.f32 %v1125, 0.0
    %1133 = vst [vmem:[#allocation2] sm:$0x1] %v1129
    %1134 = vst [vmem:[#allocation2 + $0x1] sm:$0x1] %v1130
    %1135 = vst [vmem:[#allocation2 + $0x2] sm:$0x1] %v1131
    %1136 = vst [vmem:[#allocation2 + $0x3] sm:$0x1] %v1132
    %1137 = vst [vmem:[#allocation2 + $0x3] sm:$0x2] %v1129
    %1138 = vst [vmem:[#allocation2 + $0x4] sm:$0x2] %v1130
    %1139 = vst [vmem:[#allocation2 + $0x5] sm:$0x2] %v1131
    %1140 = vst [vmem:[#allocation2 + $0x6] sm:$0x2] %v1132
    %v1141 = vld [vmem:[#allocation2] sm:$0xff]
    %v1142 = vpack.c.bf16 %v1141, %v1141
    %v1143 = vld [vmem:[%s9] sm:$0xf]
    %v1144 = vld [vmem:[%s9 + $0x4] sm:$0xf]
    %v1145 = vld [vmem:[%s10] sm:$0xf]
    %v1146 = vld [vmem:[%s10 + $0x4] sm:$0xf]
    %v1147 = vld [vmem:[%s10 + $0x8] sm:$0xf]
    %v1148 = vld [vmem:[%s10 + $0xc] sm:$0xf]
    %v1149 = vld [vmem:[%s10 + $0x10] sm:$0xf]
    %v1150 = vld [vmem:[%s10 + $0x14] sm:$0xf]
    %v1151 = vld [vmem:[%s10 + $0x18] sm:$0xf]
    %v1152 = vld [vmem:[%s10 + $0x1c] sm:$0xf]
    %v1153 = vld [vmem:[%s10 + $0x20] sm:$0xf]
    %v1154 = vld [vmem:[%s10 + $0x24] sm:$0xf]
    %v1155 = vld [vmem:[%s10 + $0x28] sm:$0xf]
    %v1156 = vld [vmem:[%s10 + $0x2c] sm:$0xf]
    %v1157 = vld [vmem:[%s10 + $0x30] sm:$0xf]
    %v1158 = vld [vmem:[%s10 + $0x34] sm:$0xf]
    %v1159 = vld [vmem:[%s10 + $0x38] sm:$0xf]
    %v1160 = vld [vmem:[%s10 + $0x3c] sm:$0xf]
    %v1163 = vunpack.c.l.b16 %v1143
    %v1164 = vunpack.c.l.b16 %v1144
    %v1165 = vpack.c.b16 %v1164, %v1163
    %vm1166 = vcmask 64512
    %v1168 = vsel %vm1166, %v1165, 0
    %v1171 = vsel %vm923, %v1142, 0
    %1173 = vmatprep.subr.bf16.mxu0 0
    %1174 = vmatpush1.bf16.msra.mxu0 0
    %1175 = vmatprep.subr.bf16.mxu0 0
    %1176 = vmatpush1.bf16.msra.mxu0 0
    %1177 = vmatprep.subr.bf16.mxu0 0
    %1178 = vmatpush1.bf16.msra.mxu0 0
    %1179 = vmatprep.subr.bf16.mxu0 0
    %1180 = vmatpush1.bf16.msra.mxu0 0
    %1181 = vmatprep.subr.bf16.mxu0 0
    %1182 = vmatpush1.bf16.msra.mxu0 0
    %1183 = vmatprep.subr.bf16.mxu0 0
    %1184 = vmatpush1.bf16.msra.mxu0 0
    %1185 = vmatprep.subr.bf16.mxu0 0
    %1186 = vmatpush1.bf16.msra.mxu0 0
    %1187 = vmatprep.subr.bf16.mxu0 0
    %1188 = vmatpush1.bf16.msra.mxu0 %v1171
    %1189 = vmatprep.subr.bf16.mxu0 0
    %1190 = vmatpush2.bf16.msra.mxu0 0
    %1191 = vmatprep.subr.bf16.mxu0 0
    %1192 = vmatpush2.bf16.msra.mxu0 0
    %1193 = vmatprep.subr.bf16.mxu0 0
    %1194 = vmatpush2.bf16.msra.mxu0 0
    %1195 = vmatprep.subr.bf16.mxu0 0
    %1196 = vmatpush2.bf16.msra.mxu0 0
    %1197 = vmatprep.subr.bf16.mxu0 0
    %1198 = vmatpush2.bf16.msra.mxu0 0
    %1199 = vmatprep.subr.bf16.mxu0 0
    %1200 = vmatpush2.bf16.msra.mxu0 0
    %1201 = vmatprep.subr.bf16.mxu0 0
    %1202 = vmatpush2.bf16.msra.mxu0 0
    %1203 = vmatprep.subr.bf16.mxu0 0
    %1204 = vmatpush2.bf16.msra.mxu0 0
    %1205 = vmatprep.mubr.bf16.mxu0 0
    %1206 = vmatmul.mubr.bf16.gmra.mxu0 %v1168
    %v1207 = vpop.f32.mrf.mxu0
    %v1208 = vadd.f32 0.0, %v1207
    %v1209 = vpop.f32.mrf.mxu0
    %v1210 = vpop.f32.mrf.mxu0
    %v1211 = vadd.f32 0.0, %v1210
    %v1212 = vpop.f32.mrf.mxu0
    %1213 = vdwg.mxu0
    %v1214 = vpack.c.bf16 %v1211, %v1208
    %v1215 = vld [vmem:[%s9 + $0x8] sm:$0xf]
    %v1216 = vld [vmem:[%s9 + $0xc] sm:$0xf]
    %v1217 = vld [vmem:[%s10 + $0x40] sm:$0xf]
    %v1218 = vld [vmem:[%s10 + $0x44] sm:$0xf]
    %v1219 = vld [vmem:[%s10 + $0x48] sm:$0xf]
    %v1220 = vld [vmem:[%s10 + $0x4c] sm:$0xf]
    %v1221 = vld [vmem:[%s10 + $0x50] sm:$0xf]
    %v1222 = vld [vmem:[%s10 + $0x54] sm:$0xf]
    %v1223 = vld [vmem:[%s10 + $0x58] sm:$0xf]
    %v1224 = vld [vmem:[%s10 + $0x5c] sm:$0xf]
    %v1225 = vld [vmem:[%s10 + $0x60] sm:$0xf]
    %v1226 = vld [vmem:[%s10 + $0x64] sm:$0xf]
    %v1227 = vld [vmem:[%s10 + $0x68] sm:$0xf]
    %v1228 = vld [vmem:[%s10 + $0x6c] sm:$0xf]
    %v1229 = vld [vmem:[%s10 + $0x70] sm:$0xf]
    %v1230 = vld [vmem:[%s10 + $0x74] sm:$0xf]
    %v1231 = vld [vmem:[%s10 + $0x78] sm:$0xf]
    %v1232 = vld [vmem:[%s10 + $0x7c] sm:$0xf]
    %v1235 = vunpack.c.l.b16 %v1215
    %v1236 = vunpack.c.l.b16 %v1216
    %v1237 = vpack.c.b16 %v1236, %v1235
    %v1239 = vsel %vm1166, %v1237, 0
    %1241 = vmatprep.subr.bf16.mxu0 0
    %1242 = vmatpush1.bf16.msra.mxu0 0
    %1243 = vmatprep.subr.bf16.mxu0 0
    %1244 = vmatpush1.bf16.msra.mxu0 0
    %1245 = vmatprep.subr.bf16.mxu0 0
    %1246 = vmatpush1.bf16.msra.mxu0 0
    %1247 = vmatprep.subr.bf16.mxu0 0
    %1248 = vmatpush1.bf16.msra.mxu0 0
    %1249 = vmatprep.subr.bf16.mxu0 0
    %1250 = vmatpush1.bf16.msra.mxu0 0
    %1251 = vmatprep.subr.bf16.mxu0 0
    %1252 = vmatpush1.bf16.msra.mxu0 0
    %1253 = vmatprep.subr.bf16.mxu0 0
    %1254 = vmatpush1.bf16.msra.mxu0 0
    %1255 = vmatprep.subr.bf16.mxu0 0
    %1256 = vmatpush1.bf16.msra.mxu0 %v1171
    %1257 = vmatprep.subr.bf16.mxu0 0
    %1258 = vmatpush2.bf16.msra.mxu0 0
    %1259 = vmatprep.subr.bf16.mxu0 0
    %1260 = vmatpush2.bf16.msra.mxu0 0
    %1261 = vmatprep.subr.bf16.mxu0 0
    %1262 = vmatpush2.bf16.msra.mxu0 0
    %1263 = vmatprep.subr.bf16.mxu0 0
    %1264 = vmatpush2.bf16.msra.mxu0 0
    %1265 = vmatprep.subr.bf16.mxu0 0
    %1266 = vmatpush2.bf16.msra.mxu0 0
    %1267 = vmatprep.subr.bf16.mxu0 0
    %1268 = vmatpush2.bf16.msra.mxu0 0
    %1269 = vmatprep.subr.bf16.mxu0 0
    %1270 = vmatpush2.bf16.msra.mxu0 0
    %1271 = vmatprep.subr.bf16.mxu0 0
    %1272 = vmatpush2.bf16.msra.mxu0 0
    %1273 = vmatprep.mubr.bf16.mxu0 0
    %1274 = vmatmul.mubr.bf16.gmra.mxu0 %v1239
    %v1275 = vpop.f32.mrf.mxu0
    %v1276 = vadd.f32 0.0, %v1275
    %v1277 = vpop.f32.mrf.mxu0
    %v1278 = vpop.f32.mrf.mxu0
    %v1279 = vadd.f32 0.0, %v1278
    %v1280 = vpop.f32.mrf.mxu0
    %1281 = vdwg.mxu0
    %v1282 = vpack.c.bf16 %v1279, %v1276
    %v1299 = vunpack.c.l.b16 %v1217
    %v1300 = vunpack.c.l.b16 %v1218
    %v1301 = vunpack.c.l.b16 %v1219
    %v1302 = vunpack.c.l.b16 %v1220
    %v1303 = vunpack.c.l.b16 %v1221
    %v1304 = vunpack.c.l.b16 %v1222
    %v1305 = vunpack.c.l.b16 %v1223
    %v1306 = vunpack.c.l.b16 %v1224
    %v1307 = vunpack.c.l.b16 %v1225
    %v1308 = vunpack.c.l.b16 %v1226
    %v1309 = vunpack.c.l.b16 %v1227
    %v1310 = vunpack.c.l.b16 %v1228
    %v1311 = vunpack.c.l.b16 %v1229
    %v1312 = vunpack.c.l.b16 %v1230
    %v1313 = vunpack.c.l.b16 %v1231
    %v1314 = vunpack.c.l.b16 %v1232
    %v1315 = vpack.c.b16 %v1300, %v1299
    %v1316 = vpack.c.b16 %v1302, %v1301
    %v1317 = vpack.c.b16 %v1304, %v1303
    %v1318 = vpack.c.b16 %v1306, %v1305
    %v1319 = vpack.c.b16 %v1308, %v1307
    %v1320 = vpack.c.b16 %v1310, %v1309
    %v1321 = vpack.c.b16 %v1312, %v1311
    %v1322 = vpack.c.b16 %v1314, %v1313
    %1331 = vmatprep.subr.bf16.mxu0 0
    %1332 = vmatpush1.bf16.msra.mxu0 %v1322
    %1333 = vmatprep.subr.bf16.mxu0 0
    %1334 = vmatpush1.bf16.msra.mxu0 %v1321
    %1335 = vmatprep.subr.bf16.mxu0 0
    %1336 = vmatpush1.bf16.msra.mxu0 %v1320
    %1337 = vmatprep.subr.bf16.mxu0 0
    %1338 = vmatpush1.bf16.msra.mxu0 %v1319
    %1339 = vmatprep.subr.bf16.mxu0 0
    %1340 = vmatpush1.bf16.msra.mxu0 %v1318
    %1341 = vmatprep.subr.bf16.mxu0 0
    %1342 = vmatpush1.bf16.msra.mxu0 %v1317
    %1343 = vmatprep.subr.bf16.mxu0 0
    %1344 = vmatpush1.bf16.msra.mxu0 %v1316
    %1345 = vmatprep.subr.bf16.mxu0 0
    %1346 = vmatpush1.bf16.msra.mxu0 %v1315
    %1347 = vmatprep.subr.bf16.mxu0 0
    %1348 = vmatpush2.bf16.msra.mxu0 0
    %1349 = vmatprep.subr.bf16.mxu0 0
    %1350 = vmatpush2.bf16.msra.mxu0 0
    %1351 = vmatprep.subr.bf16.mxu0 0
    %1352 = vmatpush2.bf16.msra.mxu0 0
    %1353 = vmatprep.subr.bf16.mxu0 0
    %1354 = vmatpush2.bf16.msra.mxu0 0
    %1355 = vmatprep.subr.bf16.mxu0 0
    %1356 = vmatpush2.bf16.msra.mxu0 0
    %1357 = vmatprep.subr.bf16.mxu0 0
    %1358 = vmatpush2.bf16.msra.mxu0 0
    %1359 = vmatprep.subr.bf16.mxu0 0
    %1360 = vmatpush2.bf16.msra.mxu0 0
    %1361 = vmatprep.subr.bf16.mxu0 0
    %1362 = vmatpush2.bf16.msra.mxu0 0
    %1363 = vmatprep.mubr.bf16.mxu0 0
    %1364 = vmatmul.mubr.bf16.gmra.mxu0 %v1282
    %v1365 = vpop.f32.mrf.mxu0
    %v1366 = vadd.f32 0.0, %v1365
    %v1367 = vpop.f32.mrf.mxu0
    %v1368 = vpop.f32.mrf.mxu0
    %v1369 = vadd.f32 0.0, %v1368
    %v1370 = vpop.f32.mrf.mxu0
    %1371 = vdwg.mxu0
    %v1388 = vunpack.c.l.b16 %v1145
    %v1389 = vunpack.c.l.b16 %v1146
    %v1390 = vunpack.c.l.b16 %v1147
    %v1391 = vunpack.c.l.b16 %v1148
    %v1392 = vunpack.c.l.b16 %v1149
    %v1393 = vunpack.c.l.b16 %v1150
    %v1394 = vunpack.c.l.b16 %v1151
    %v1395 = vunpack.c.l.b16 %v1152
    %v1396 = vunpack.c.l.b16 %v1153
    %v1397 = vunpack.c.l.b16 %v1154
    %v1398 = vunpack.c.l.b16 %v1155
    %v1399 = vunpack.c.l.b16 %v1156
    %v1400 = vunpack.c.l.b16 %v1157
    %v1401 = vunpack.c.l.b16 %v1158
    %v1402 = vunpack.c.l.b16 %v1159
    %v1403 = vunpack.c.l.b16 %v1160
    %v1404 = vpack.c.b16 %v1389, %v1388
    %v1405 = vpack.c.b16 %v1391, %v1390
    %v1406 = vpack.c.b16 %v1393, %v1392
    %v1407 = vpack.c.b16 %v1395, %v1394
    %v1408 = vpack.c.b16 %v1397, %v1396
    %v1409 = vpack.c.b16 %v1399, %v1398
    %v1410 = vpack.c.b16 %v1401, %v1400
    %v1411 = vpack.c.b16 %v1403, %v1402
    %1420 = vmatprep.subr.bf16.mxu0 0
    %1421 = vmatpush1.bf16.msra.mxu0 %v1411
    %1422 = vmatprep.subr.bf16.mxu0 0
    %1423 = vmatpush1.bf16.msra.mxu0 %v1410
    %1424 = vmatprep.subr.bf16.mxu0 0
    %1425 = vmatpush1.bf16.msra.mxu0 %v1409
    %1426 = vmatprep.subr.bf16.mxu0 0
    %1427 = vmatpush1.bf16.msra.mxu0 %v1408
    %1428 = vmatprep.subr.bf16.mxu0 0
    %1429 = vmatpush1.bf16.msra.mxu0 %v1407
    %1430 = vmatprep.subr.bf16.mxu0 0
    %1431 = vmatpush1.bf16.msra.mxu0 %v1406
    %1432 = vmatprep.subr.bf16.mxu0 0
    %1433 = vmatpush1.bf16.msra.mxu0 %v1405
    %1434 = vmatprep.subr.bf16.mxu0 0
    %1435 = vmatpush1.bf16.msra.mxu0 %v1404
    %1436 = vmatprep.subr.bf16.mxu0 0
    %1437 = vmatpush2.bf16.msra.mxu0 0
    %1438 = vmatprep.subr.bf16.mxu0 0
    %1439 = vmatpush2.bf16.msra.mxu0 0
    %1440 = vmatprep.subr.bf16.mxu0 0
    %1441 = vmatpush2.bf16.msra.mxu0 0
    %1442 = vmatprep.subr.bf16.mxu0 0
    %1443 = vmatpush2.bf16.msra.mxu0 0
    %1444 = vmatprep.subr.bf16.mxu0 0
    %1445 = vmatpush2.bf16.msra.mxu0 0
    %1446 = vmatprep.subr.bf16.mxu0 0
    %1447 = vmatpush2.bf16.msra.mxu0 0
    %1448 = vmatprep.subr.bf16.mxu0 0
    %1449 = vmatpush2.bf16.msra.mxu0 0
    %1450 = vmatprep.subr.bf16.mxu0 0
    %1451 = vmatpush2.bf16.msra.mxu0 0
    %1452 = vmatprep.mubr.bf16.mxu0 0
    %1453 = vmatmul.mubr.bf16.gmra.mxu0 %v1214
    %v1454 = vpop.f32.mrf.mxu0
    %v1455 = vadd.f32 %v1366, %v1454
    %v1456 = vpop.f32.mrf.mxu0
    %v1457 = vpop.f32.mrf.mxu0
    %v1458 = vadd.f32 %v1369, %v1457
    %v1459 = vpop.f32.mrf.mxu0
    %1460 = vdwg.mxu0
    %v1461 = vld [vmem:[%s9 + $0x10] sm:$0xf]
    %v1462 = vld [vmem:[%s9 + $0x14] sm:$0xf]
    %v1463 = vld [vmem:[%s10 + $0x80] sm:$0xf]
    %v1464 = vld [vmem:[%s10 + $0x84] sm:$0xf]
    %v1465 = vld [vmem:[%s10 + $0x88] sm:$0xf]
    %v1466 = vld [vmem:[%s10 + $0x8c] sm:$0xf]
    %v1467 = vld [vmem:[%s10 + $0x90] sm:$0xf]
    %v1468 = vld [vmem:[%s10 + $0x94] sm:$0xf]
    %v1469 = vld [vmem:[%s10 + $0x98] sm:$0xf]
    %v1470 = vld [vmem:[%s10 + $0x9c] sm:$0xf]
    %v1471 = vld [vmem:[%s10 + $0xa0] sm:$0xf]
    %v1472 = vld [vmem:[%s10 + $0xa4] sm:$0xf]
    %v1473 = vld [vmem:[%s10 + $0xa8] sm:$0xf]
    %v1474 = vld [vmem:[%s10 + $0xac] sm:$0xf]
    %v1475 = vld [vmem:[%s10 + $0xb0] sm:$0xf]
    %v1476 = vld [vmem:[%s10 + $0xb4] sm:$0xf]
    %v1477 = vld [vmem:[%s10 + $0xb8] sm:$0xf]
    %v1478 = vld [vmem:[%s10 + $0xbc] sm:$0xf]
    %v1481 = vunpack.c.l.b16 %v1461
    %v1482 = vunpack.c.l.b16 %v1462
    %v1483 = vpack.c.b16 %v1482, %v1481
    %v1485 = vsel %vm1166, %v1483, 0
    %1487 = vmatprep.subr.bf16.mxu0 0
    %1488 = vmatpush1.bf16.msra.mxu0 0
    %1489 = vmatprep.subr.bf16.mxu0 0
    %1490 = vmatpush1.bf16.msra.mxu0 0
    %1491 = vmatprep.subr.bf16.mxu0 0
    %1492 = vmatpush1.bf16.msra.mxu0 0
    %1493 = vmatprep.subr.bf16.mxu0 0
    %1494 = vmatpush1.bf16.msra.mxu0 0
    %1495 = vmatprep.subr.bf16.mxu0 0
    %1496 = vmatpush1.bf16.msra.mxu0 0
    %1497 = vmatprep.subr.bf16.mxu0 0
    %1498 = vmatpush1.bf16.msra.mxu0 0
    %1499 = vmatprep.subr.bf16.mxu0 0
    %1500 = vmatpush1.bf16.msra.mxu0 0
    %1501 = vmatprep.subr.bf16.mxu0 0
    %1502 = vmatpush1.bf16.msra.mxu0 %v1171
    %1503 = vmatprep.subr.bf16.mxu0 0
    %1504 = vmatpush2.bf16.msra.mxu0 0
    %1505 = vmatprep.subr.bf16.mxu0 0
    %1506 = vmatpush2.bf16.msra.mxu0 0
    %1507 = vmatprep.subr.bf16.mxu0 0
    %1508 = vmatpush2.bf16.msra.mxu0 0
    %1509 = vmatprep.subr.bf16.mxu0 0
    %1510 = vmatpush2.bf16.msra.mxu0 0
    %1511 = vmatprep.subr.bf16.mxu0 0
    %1512 = vmatpush2.bf16.msra.mxu0 0
    %1513 = vmatprep.subr.bf16.mxu0 0
    %1514 = vmatpush2.bf16.msra.mxu0 0
    %1515 = vmatprep.subr.bf16.mxu0 0
    %1516 = vmatpush2.bf16.msra.mxu0 0
    %1517 = vmatprep.subr.bf16.mxu0 0
    %1518 = vmatpush2.bf16.msra.mxu0 0
    %1519 = vmatprep.mubr.bf16.mxu0 0
    %1520 = vmatmul.mubr.bf16.gmra.mxu0 %v1485
    %v1521 = vpop.f32.mrf.mxu0
    %v1522 = vadd.f32 0.0, %v1521
    %v1523 = vpop.f32.mrf.mxu0
    %v1524 = vpop.f32.mrf.mxu0
    %v1525 = vadd.f32 0.0, %v1524
    %v1526 = vpop.f32.mrf.mxu0
    %1527 = vdwg.mxu0
    %v1528 = vpack.c.bf16 %v1525, %v1522
    %v1545 = vunpack.c.l.b16 %v1463
    %v1546 = vunpack.c.l.b16 %v1464
    %v1547 = vunpack.c.l.b16 %v1465
    %v1548 = vunpack.c.l.b16 %v1466
    %v1549 = vunpack.c.l.b16 %v1467
    %v1550 = vunpack.c.l.b16 %v1468
    %v1551 = vunpack.c.l.b16 %v1469
    %v1552 = vunpack.c.l.b16 %v1470
    %v1553 = vunpack.c.l.b16 %v1471
    %v1554 = vunpack.c.l.b16 %v1472
    %v1555 = vunpack.c.l.b16 %v1473
    %v1556 = vunpack.c.l.b16 %v1474
    %v1557 = vunpack.c.l.b16 %v1475
    %v1558 = vunpack.c.l.b16 %v1476
    %v1559 = vunpack.c.l.b16 %v1477
    %v1560 = vunpack.c.l.b16 %v1478
    %v1561 = vpack.c.b16 %v1546, %v1545
    %v1562 = vpack.c.b16 %v1548, %v1547
    %v1563 = vpack.c.b16 %v1550, %v1549
    %v1564 = vpack.c.b16 %v1552, %v1551
    %v1565 = vpack.c.b16 %v1554, %v1553
    %v1566 = vpack.c.b16 %v1556, %v1555
    %v1567 = vpack.c.b16 %v1558, %v1557
    %v1568 = vpack.c.b16 %v1560, %v1559
    %1577 = vmatprep.subr.bf16.mxu0 0
    %1578 = vmatpush1.bf16.msra.mxu0 %v1568
    %1579 = vmatprep.subr.bf16.mxu0 0
    %1580 = vmatpush1.bf16.msra.mxu0 %v1567
    %1581 = vmatprep.subr.bf16.mxu0 0
    %1582 = vmatpush1.bf16.msra.mxu0 %v1566
    %1583 = vmatprep.subr.bf16.mxu0 0
    %1584 = vmatpush1.bf16.msra.mxu0 %v1565
    %1585 = vmatprep.subr.bf16.mxu0 0
    %1586 = vmatpush1.bf16.msra.mxu0 %v1564
    %1587 = vmatprep.subr.bf16.mxu0 0
    %1588 = vmatpush1.bf16.msra.mxu0 %v1563
    %1589 = vmatprep.subr.bf16.mxu0 0
    %1590 = vmatpush1.bf16.msra.mxu0 %v1562
    %1591 = vmatprep.subr.bf16.mxu0 0
    %1592 = vmatpush1.bf16.msra.mxu0 %v1561
    %1593 = vmatprep.subr.bf16.mxu0 0
    %1594 = vmatpush2.bf16.msra.mxu0 0
    %1595 = vmatprep.subr.bf16.mxu0 0
    %1596 = vmatpush2.bf16.msra.mxu0 0
    %1597 = vmatprep.subr.bf16.mxu0 0
    %1598 = vmatpush2.bf16.msra.mxu0 0
    %1599 = vmatprep.subr.bf16.mxu0 0
    %1600 = vmatpush2.bf16.msra.mxu0 0
    %1601 = vmatprep.subr.bf16.mxu0 0
    %1602 = vmatpush2.bf16.msra.mxu0 0
    %1603 = vmatprep.subr.bf16.mxu0 0
    %1604 = vmatpush2.bf16.msra.mxu0 0
    %1605 = vmatprep.subr.bf16.mxu0 0
    %1606 = vmatpush2.bf16.msra.mxu0 0
    %1607 = vmatprep.subr.bf16.mxu0 0
    %1608 = vmatpush2.bf16.msra.mxu0 0
    %1609 = vmatprep.mubr.bf16.mxu0 0
    %1610 = vmatmul.mubr.bf16.gmra.mxu0 %v1528
    %v1611 = vpop.f32.mrf.mxu0
    %v1612 = vadd.f32 0.0, %v1611
    %v1613 = vpop.f32.mrf.mxu0
    %v1614 = vpop.f32.mrf.mxu0
    %v1615 = vadd.f32 0.0, %v1614
    %v1616 = vpop.f32.mrf.mxu0
    %1617 = vdwg.mxu0
    %v1618 = vadd.f32 %v1455, %v1612
    %v1619 = vadd.f32 %v1458, %v1615
    %v1620 = vld [vmem:[%s11] sm:$0x1]
    %v1622 = vlaneseq
    %v1623 = vshrl.u32 %v1622, 7
    %v1624 = vsub.s32 0, %v1623
    %v1625 = vrot.slane %v1620, %v1624
    %v1627 = vadd.f32 %v1618, %v1625
    %v1628 = vadd.f32 %v1619, %v1625
    %v1629 = vmax.f32 %v1627, 0.0
    %v1630 = vmax.f32 %v1628, 0.0
    %v1631 = vpack.c.bf16 %v1630, %v1629
    %v1632 = vld [vmem:[%s12] sm:$0xf]
    %v1633 = vld [vmem:[%s12 + $0x4] sm:$0xf]
    %v1634 = vld [vmem:[%s12 + $0x8] sm:$0xf]
    %v1635 = vld [vmem:[%s12 + $0xc] sm:$0xf]
    %v1636 = vld [vmem:[%s13] sm:$0xf]
    %v1637 = vld [vmem:[%s13 + $0x4] sm:$0xf]
    %v1638 = vld [vmem:[%s13 + $0x8] sm:$0xf]
    %v1639 = vld [vmem:[%s13 + $0xc] sm:$0xf]
    %v1640 = vld [vmem:[%s13 + $0x10] sm:$0xf]
    %v1641 = vld [vmem:[%s13 + $0x14] sm:$0xf]
    %v1642 = vld [vmem:[%s13 + $0x18] sm:$0xf]
    %v1643 = vld [vmem:[%s13 + $0x1c] sm:$0xf]
    %v1644 = vld [vmem:[%s13 + $0x20] sm:$0xf]
    %v1645 = vld [vmem:[%s13 + $0x24] sm:$0xf]
    %v1646 = vld [vmem:[%s13 + $0x28] sm:$0xf]
    %v1647 = vld [vmem:[%s13 + $0x2c] sm:$0xf]
    %v1648 = vld [vmem:[%s13 + $0x30] sm:$0xf]
    %v1649 = vld [vmem:[%s13 + $0x34] sm:$0xf]
    %v1650 = vld [vmem:[%s13 + $0x38] sm:$0xf]
    %v1651 = vld [vmem:[%s13 + $0x3c] sm:$0xf]
    %v1656 = vunpack.c.l.b16 %v1632
    %v1657 = vunpack.c.l.b16 %v1633
    %v1658 = vunpack.c.l.b16 %v1634
    %v1659 = vunpack.c.l.b16 %v1635
    %v1660 = vpack.c.b16 %v1657, %v1656
    %v1661 = vpack.c.b16 %v1659, %v1658
    %v1663 = vsel %vm482, %v1660, 0
    %v1666 = vsel %vm482, %v1661, 0
    %1668 = vmatprep.subr.bf16.mxu0 0
    %1669 = vmatpush1.bf16.msra.mxu0 0
    %1670 = vmatprep.subr.bf16.mxu0 0
    %1671 = vmatpush1.bf16.msra.mxu0 0
    %1672 = vmatprep.subr.bf16.mxu0 0
    %1673 = vmatpush1.bf16.msra.mxu0 0
    %1674 = vmatprep.subr.bf16.mxu0 0
    %1675 = vmatpush1.bf16.msra.mxu0 0
    %1676 = vmatprep.subr.bf16.mxu0 0
    %1677 = vmatpush1.bf16.msra.mxu0 0
    %1678 = vmatprep.subr.bf16.mxu0 0
    %1679 = vmatpush1.bf16.msra.mxu0 0
    %1680 = vmatprep.subr.bf16.mxu0 0
    %1681 = vmatpush1.bf16.msra.mxu0 0
    %1682 = vmatprep.subr.bf16.mxu0 0
    %1683 = vmatpush1.bf16.msra.mxu0 %v1631
    %1684 = vmatprep.subr.bf16.mxu0 0
    %1685 = vmatpush2.bf16.msra.mxu0 0
    %1686 = vmatprep.subr.bf16.mxu0 0
    %1687 = vmatpush2.bf16.msra.mxu0 0
    %1688 = vmatprep.subr.bf16.mxu0 0
    %1689 = vmatpush2.bf16.msra.mxu0 0
    %1690 = vmatprep.subr.bf16.mxu0 0
    %1691 = vmatpush2.bf16.msra.mxu0 0
    %1692 = vmatprep.subr.bf16.mxu0 0
    %1693 = vmatpush2.bf16.msra.mxu0 0
    %1694 = vmatprep.subr.bf16.mxu0 0
    %1695 = vmatpush2.bf16.msra.mxu0 0
    %1696 = vmatprep.subr.bf16.mxu0 0
    %1697 = vmatpush2.bf16.msra.mxu0 0
    %1698 = vmatprep.subr.bf16.mxu0 0
    %1699 = vmatpush2.bf16.msra.mxu0 0
    %1700 = vmatprep.mubr.bf16.mxu0 0
    %1701 = vmatmul.mubr.bf16.gmra.mxu0 %v1663
    %v1702 = vpop.f32.mrf.mxu0
    %v1703 = vadd.f32 0.0, %v1702
    %v1704 = vpop.f32.mrf.mxu0
    %v1705 = vpop.f32.mrf.mxu0
    %v1706 = vadd.f32 0.0, %v1705
    %v1707 = vpop.f32.mrf.mxu0
    %1708 = vmatprep.mubr.bf16.mxu0 0
    %1709 = vmatmul.mubr.bf16.gmra.mxu0 %v1666
    %v1710 = vpop.f32.mrf.mxu0
    %v1711 = vadd.f32 0.0, %v1710
    %v1712 = vpop.f32.mrf.mxu0
    %v1713 = vpop.f32.mrf.mxu0
    %v1714 = vadd.f32 0.0, %v1713
    %v1715 = vpop.f32.mrf.mxu0
    %1716 = vdwg.mxu0
    %v1717 = vpack.c.bf16 %v1706, %v1703
    %v1718 = vpack.c.bf16 %v1714, %v1711
    %v1719 = vld [vmem:[%s12 + $0x10] sm:$0xf]
    %v1720 = vld [vmem:[%s12 + $0x14] sm:$0xf]
    %v1721 = vld [vmem:[%s12 + $0x18] sm:$0xf]
    %v1722 = vld [vmem:[%s12 + $0x1c] sm:$0xf]
    %v1723 = vld [vmem:[%s13 + $0x40] sm:$0xf]
    %v1724 = vld [vmem:[%s13 + $0x44] sm:$0xf]
    %v1725 = vld [vmem:[%s13 + $0x48] sm:$0xf]
    %v1726 = vld [vmem:[%s13 + $0x4c] sm:$0xf]
    %v1727 = vld [vmem:[%s13 + $0x50] sm:$0xf]
    %v1728 = vld [vmem:[%s13 + $0x54] sm:$0xf]
    %v1729 = vld [vmem:[%s13 + $0x58] sm:$0xf]
    %v1730 = vld [vmem:[%s13 + $0x5c] sm:$0xf]
    %v1731 = vld [vmem:[%s13 + $0x60] sm:$0xf]
    %v1732 = vld [vmem:[%s13 + $0x64] sm:$0xf]
    %v1733 = vld [vmem:[%s13 + $0x68] sm:$0xf]
    %v1734 = vld [vmem:[%s13 + $0x6c] sm:$0xf]
    %v1735 = vld [vmem:[%s13 + $0x70] sm:$0xf]
    %v1736 = vld [vmem:[%s13 + $0x74] sm:$0xf]
    %v1737 = vld [vmem:[%s13 + $0x78] sm:$0xf]
    %v1738 = vld [vmem:[%s13 + $0x7c] sm:$0xf]
    %v1743 = vunpack.c.l.b16 %v1719
    %v1744 = vunpack.c.l.b16 %v1720
    %v1745 = vunpack.c.l.b16 %v1721
    %v1746 = vunpack.c.l.b16 %v1722
    %v1747 = vpack.c.b16 %v1744, %v1743
    %v1748 = vpack.c.b16 %v1746, %v1745
    %v1750 = vsel %vm482, %v1747, 0
    %v1753 = vsel %vm482, %v1748, 0
    %1755 = vmatprep.subr.bf16.mxu0 0
    %1756 = vmatpush1.bf16.msra.mxu0 0
    %1757 = vmatprep.subr.bf16.mxu0 0
    %1758 = vmatpush1.bf16.msra.mxu0 0
    %1759 = vmatprep.subr.bf16.mxu0 0
    %1760 = vmatpush1.bf16.msra.mxu0 0
    %1761 = vmatprep.subr.bf16.mxu0 0
    %1762 = vmatpush1.bf16.msra.mxu0 0
    %1763 = vmatprep.subr.bf16.mxu0 0
    %1764 = vmatpush1.bf16.msra.mxu0 0
    %1765 = vmatprep.subr.bf16.mxu0 0
    %1766 = vmatpush1.bf16.msra.mxu0 0
    %1767 = vmatprep.subr.bf16.mxu0 0
    %1768 = vmatpush1.bf16.msra.mxu0 0
    %1769 = vmatprep.subr.bf16.mxu0 0
    %1770 = vmatpush1.bf16.msra.mxu0 %v1631
    %1771 = vmatprep.subr.bf16.mxu0 0
    %1772 = vmatpush2.bf16.msra.mxu0 0
    %1773 = vmatprep.subr.bf16.mxu0 0
    %1774 = vmatpush2.bf16.msra.mxu0 0
    %1775 = vmatprep.subr.bf16.mxu0 0
    %1776 = vmatpush2.bf16.msra.mxu0 0
    %1777 = vmatprep.subr.bf16.mxu0 0
    %1778 = vmatpush2.bf16.msra.mxu0 0
    %1779 = vmatprep.subr.bf16.mxu0 0
    %1780 = vmatpush2.bf16.msra.mxu0 0
    %1781 = vmatprep.subr.bf16.mxu0 0
    %1782 = vmatpush2.bf16.msra.mxu0 0
    %1783 = vmatprep.subr.bf16.mxu0 0
    %1784 = vmatpush2.bf16.msra.mxu0 0
    %1785 = vmatprep.subr.bf16.mxu0 0
    %1786 = vmatpush2.bf16.msra.mxu0 0
    %1787 = vmatprep.mubr.bf16.mxu0 0
    %1788 = vmatmul.mubr.bf16.gmra.mxu0 %v1750
    %v1789 = vpop.f32.mrf.mxu0
    %v1790 = vadd.f32 0.0, %v1789
    %v1791 = vpop.f32.mrf.mxu0
    %v1792 = vpop.f32.mrf.mxu0
    %v1793 = vadd.f32 0.0, %v1792
    %v1794 = vpop.f32.mrf.mxu0
    %1795 = vmatprep.mubr.bf16.mxu0 0
    %1796 = vmatmul.mubr.bf16.gmra.mxu0 %v1753
    %v1797 = vpop.f32.mrf.mxu0
    %v1798 = vadd.f32 0.0, %v1797
    %v1799 = vpop.f32.mrf.mxu0
    %v1800 = vpop.f32.mrf.mxu0
    %v1801 = vadd.f32 0.0, %v1800
    %v1802 = vpop.f32.mrf.mxu0
    %1803 = vdwg.mxu0
    %v1804 = vpack.c.bf16 %v1793, %v1790
    %v1805 = vpack.c.bf16 %v1801, %v1798
    %v1822 = vunpack.c.l.b16 %v1723
    %v1823 = vunpack.c.l.b16 %v1724
    %v1824 = vunpack.c.l.b16 %v1725
    %v1825 = vunpack.c.l.b16 %v1726
    %v1826 = vunpack.c.l.b16 %v1727
    %v1827 = vunpack.c.l.b16 %v1728
    %v1828 = vunpack.c.l.b16 %v1729
    %v1829 = vunpack.c.l.b16 %v1730
    %v1830 = vunpack.c.l.b16 %v1731
    %v1831 = vunpack.c.l.b16 %v1732
    %v1832 = vunpack.c.l.b16 %v1733
    %v1833 = vunpack.c.l.b16 %v1734
    %v1834 = vunpack.c.l.b16 %v1735
    %v1835 = vunpack.c.l.b16 %v1736
    %v1836 = vunpack.c.l.b16 %v1737
    %v1837 = vunpack.c.l.b16 %v1738
    %v1838 = vpack.c.b16 %v1823, %v1822
    %v1839 = vpack.c.b16 %v1825, %v1824
    %v1840 = vpack.c.b16 %v1827, %v1826
    %v1841 = vpack.c.b16 %v1829, %v1828
    %v1842 = vpack.c.b16 %v1831, %v1830
    %v1843 = vpack.c.b16 %v1833, %v1832
    %v1844 = vpack.c.b16 %v1835, %v1834
    %v1845 = vpack.c.b16 %v1837, %v1836
    %1854 = vmatprep.subr.bf16.mxu0 0
    %1855 = vmatpush1.bf16.msra.mxu0 %v1845
    %1856 = vmatprep.subr.bf16.mxu0 0
    %1857 = vmatpush1.bf16.msra.mxu0 %v1844
    %1858 = vmatprep.subr.bf16.mxu0 0
    %1859 = vmatpush1.bf16.msra.mxu0 %v1843
    %1860 = vmatprep.subr.bf16.mxu0 0
    %1861 = vmatpush1.bf16.msra.mxu0 %v1842
    %1862 = vmatprep.subr.bf16.mxu0 0
    %1863 = vmatpush1.bf16.msra.mxu0 %v1841
    %1864 = vmatprep.subr.bf16.mxu0 0
    %1865 = vmatpush1.bf16.msra.mxu0 %v1840
    %1866 = vmatprep.subr.bf16.mxu0 0
    %1867 = vmatpush1.bf16.msra.mxu0 %v1839
    %1868 = vmatprep.subr.bf16.mxu0 0
    %1869 = vmatpush1.bf16.msra.mxu0 %v1838
    %1870 = vmatprep.subr.bf16.mxu0 0
    %1871 = vmatpush2.bf16.msra.mxu0 0
    %1872 = vmatprep.subr.bf16.mxu0 0
    %1873 = vmatpush2.bf16.msra.mxu0 0
    %1874 = vmatprep.subr.bf16.mxu0 0
    %1875 = vmatpush2.bf16.msra.mxu0 0
    %1876 = vmatprep.subr.bf16.mxu0 0
    %1877 = vmatpush2.bf16.msra.mxu0 0
    %1878 = vmatprep.subr.bf16.mxu0 0
    %1879 = vmatpush2.bf16.msra.mxu0 0
    %1880 = vmatprep.subr.bf16.mxu0 0
    %1881 = vmatpush2.bf16.msra.mxu0 0
    %1882 = vmatprep.subr.bf16.mxu0 0
    %1883 = vmatpush2.bf16.msra.mxu0 0
    %1884 = vmatprep.subr.bf16.mxu0 0
    %1885 = vmatpush2.bf16.msra.mxu0 0
    %1886 = vmatprep.mubr.bf16.mxu0 0
    %1887 = vmatmul.mubr.bf16.gmra.mxu0 %v1804
    %v1888 = vpop.f32.mrf.mxu0
    %v1889 = vadd.f32 0.0, %v1888
    %v1890 = vpop.f32.mrf.mxu0
    %v1891 = vpop.f32.mrf.mxu0
    %v1892 = vadd.f32 0.0, %v1891
    %v1893 = vpop.f32.mrf.mxu0
    %1894 = vmatprep.mubr.bf16.mxu0 0
    %1895 = vmatmul.mubr.bf16.gmra.mxu0 %v1805
    %v1896 = vpop.f32.mrf.mxu0
    %v1897 = vadd.f32 0.0, %v1896
    %v1898 = vpop.f32.mrf.mxu0
    %v1899 = vpop.f32.mrf.mxu0
    %v1900 = vadd.f32 0.0, %v1899
    %v1901 = vpop.f32.mrf.mxu0
    %1902 = vdwg.mxu0
    %v1919 = vunpack.c.l.b16 %v1636
    %v1920 = vunpack.c.l.b16 %v1637
    %v1921 = vunpack.c.l.b16 %v1638
    %v1922 = vunpack.c.l.b16 %v1639
    %v1923 = vunpack.c.l.b16 %v1640
    %v1924 = vunpack.c.l.b16 %v1641
    %v1925 = vunpack.c.l.b16 %v1642
    %v1926 = vunpack.c.l.b16 %v1643
    %v1927 = vunpack.c.l.b16 %v1644
    %v1928 = vunpack.c.l.b16 %v1645
    %v1929 = vunpack.c.l.b16 %v1646
    %v1930 = vunpack.c.l.b16 %v1647
    %v1931 = vunpack.c.l.b16 %v1648
    %v1932 = vunpack.c.l.b16 %v1649
    %v1933 = vunpack.c.l.b16 %v1650
    %v1934 = vunpack.c.l.b16 %v1651
    %v1935 = vpack.c.b16 %v1920, %v1919
    %v1936 = vpack.c.b16 %v1922, %v1921
    %v1937 = vpack.c.b16 %v1924, %v1923
    %v1938 = vpack.c.b16 %v1926, %v1925
    %v1939 = vpack.c.b16 %v1928, %v1927
    %v1940 = vpack.c.b16 %v1930, %v1929
    %v1941 = vpack.c.b16 %v1932, %v1931
    %v1942 = vpack.c.b16 %v1934, %v1933
    %1951 = vmatprep.subr.bf16.mxu0 0
    %1952 = vmatpush1.bf16.msra.mxu0 %v1942
    %1953 = vmatprep.subr.bf16.mxu0 0
    %1954 = vmatpush1.bf16.msra.mxu0 %v1941
    %1955 = vmatprep.subr.bf16.mxu0 0
    %1956 = vmatpush1.bf16.msra.mxu0 %v1940
    %1957 = vmatprep.subr.bf16.mxu0 0
    %1958 = vmatpush1.bf16.msra.mxu0 %v1939
    %1959 = vmatprep.subr.bf16.mxu0 0
    %1960 = vmatpush1.bf16.msra.mxu0 %v1938
    %1961 = vmatprep.subr.bf16.mxu0 0
    %1962 = vmatpush1.bf16.msra.mxu0 %v1937
    %1963 = vmatprep.subr.bf16.mxu0 0
    %1964 = vmatpush1.bf16.msra.mxu0 %v1936
    %1965 = vmatprep.subr.bf16.mxu0 0
    %1966 = vmatpush1.bf16.msra.mxu0 %v1935
    %1967 = vmatprep.subr.bf16.mxu0 0
    %1968 = vmatpush2.bf16.msra.mxu0 0
    %1969 = vmatprep.subr.bf16.mxu0 0
    %1970 = vmatpush2.bf16.msra.mxu0 0
    %1971 = vmatprep.subr.bf16.mxu0 0
    %1972 = vmatpush2.bf16.msra.mxu0 0
    %1973 = vmatprep.subr.bf16.mxu0 0
    %1974 = vmatpush2.bf16.msra.mxu0 0
    %1975 = vmatprep.subr.bf16.mxu0 0
    %1976 = vmatpush2.bf16.msra.mxu0 0
    %1977 = vmatprep.subr.bf16.mxu0 0
    %1978 = vmatpush2.bf16.msra.mxu0 0
    %1979 = vmatprep.subr.bf16.mxu0 0
    %1980 = vmatpush2.bf16.msra.mxu0 0
    %1981 = vmatprep.subr.bf16.mxu0 0
    %1982 = vmatpush2.bf16.msra.mxu0 0
    %1983 = vmatprep.mubr.bf16.mxu0 0
    %1984 = vmatmul.mubr.bf16.gmra.mxu0 %v1717
    %v1985 = vpop.f32.mrf.mxu0
    %v1986 = vadd.f32 %v1889, %v1985
    %v1987 = vpop.f32.mrf.mxu0
    %v1988 = vpop.f32.mrf.mxu0
    %v1989 = vadd.f32 %v1892, %v1988
    %v1990 = vpop.f32.mrf.mxu0
    %1991 = vmatprep.mubr.bf16.mxu0 0
    %1992 = vmatmul.mubr.bf16.gmra.mxu0 %v1718
    %v1993 = vpop.f32.mrf.mxu0
    %v1994 = vadd.f32 %v1897, %v1993
    %v1995 = vpop.f32.mrf.mxu0
    %v1996 = vpop.f32.mrf.mxu0
    %v1997 = vadd.f32 %v1900, %v1996
    %v1998 = vpop.f32.mrf.mxu0
    %1999 = vdwg.mxu0
    %v2000 = vld [vmem:[%s12 + $0x20] sm:$0xf]
    %v2001 = vld [vmem:[%s12 + $0x24] sm:$0xf]
    %v2002 = vld [vmem:[%s12 + $0x28] sm:$0xf]
    %v2003 = vld [vmem:[%s12 + $0x2c] sm:$0xf]
    %v2004 = vld [vmem:[%s13 + $0x80] sm:$0xf]
    %v2005 = vld [vmem:[%s13 + $0x84] sm:$0xf]
    %v2006 = vld [vmem:[%s13 + $0x88] sm:$0xf]
    %v2007 = vld [vmem:[%s13 + $0x8c] sm:$0xf]
    %v2008 = vld [vmem:[%s13 + $0x90] sm:$0xf]
    %v2009 = vld [vmem:[%s13 + $0x94] sm:$0xf]
    %v2010 = vld [vmem:[%s13 + $0x98] sm:$0xf]
    %v2011 = vld [vmem:[%s13 + $0x9c] sm:$0xf]
    %v2012 = vld [vmem:[%s13 + $0xa0] sm:$0xf]
    %v2013 = vld [vmem:[%s13 + $0xa4] sm:$0xf]
    %v2014 = vld [vmem:[%s13 + $0xa8] sm:$0xf]
    %v2015 = vld [vmem:[%s13 + $0xac] sm:$0xf]
    %v2016 = vld [vmem:[%s13 + $0xb0] sm:$0xf]
    %v2017 = vld [vmem:[%s13 + $0xb4] sm:$0xf]
    %v2018 = vld [vmem:[%s13 + $0xb8] sm:$0xf]
    %v2019 = vld [vmem:[%s13 + $0xbc] sm:$0xf]
    %v2024 = vunpack.c.l.b16 %v2000
    %v2025 = vunpack.c.l.b16 %v2001
    %v2026 = vunpack.c.l.b16 %v2002
    %v2027 = vunpack.c.l.b16 %v2003
    %v2028 = vpack.c.b16 %v2025, %v2024
    %v2029 = vpack.c.b16 %v2027, %v2026
    %v2031 = vsel %vm482, %v2028, 0
    %v2034 = vsel %vm482, %v2029, 0
    %2036 = vmatprep.subr.bf16.mxu0 0
    %2037 = vmatpush1.bf16.msra.mxu0 0
    %2038 = vmatprep.subr.bf16.mxu0 0
    %2039 = vmatpush1.bf16.msra.mxu0 0
    %2040 = vmatprep.subr.bf16.mxu0 0
    %2041 = vmatpush1.bf16.msra.mxu0 0
    %2042 = vmatprep.subr.bf16.mxu0 0
    %2043 = vmatpush1.bf16.msra.mxu0 0
    %2044 = vmatprep.subr.bf16.mxu0 0
    %2045 = vmatpush1.bf16.msra.mxu0 0
    %2046 = vmatprep.subr.bf16.mxu0 0
    %2047 = vmatpush1.bf16.msra.mxu0 0
    %2048 = vmatprep.subr.bf16.mxu0 0
    %2049 = vmatpush1.bf16.msra.mxu0 0
    %2050 = vmatprep.subr.bf16.mxu0 0
    %2051 = vmatpush1.bf16.msra.mxu0 %v1631
    %2052 = vmatprep.subr.bf16.mxu0 0
    %2053 = vmatpush2.bf16.msra.mxu0 0
    %2054 = vmatprep.subr.bf16.mxu0 0
    %2055 = vmatpush2.bf16.msra.mxu0 0
    %2056 = vmatprep.subr.bf16.mxu0 0
    %2057 = vmatpush2.bf16.msra.mxu0 0
    %2058 = vmatprep.subr.bf16.mxu0 0
    %2059 = vmatpush2.bf16.msra.mxu0 0
    %2060 = vmatprep.subr.bf16.mxu0 0
    %2061 = vmatpush2.bf16.msra.mxu0 0
    %2062 = vmatprep.subr.bf16.mxu0 0
    %2063 = vmatpush2.bf16.msra.mxu0 0
    %2064 = vmatprep.subr.bf16.mxu0 0
    %2065 = vmatpush2.bf16.msra.mxu0 0
    %2066 = vmatprep.subr.bf16.mxu0 0
    %2067 = vmatpush2.bf16.msra.mxu0 0
    %2068 = vmatprep.mubr.bf16.mxu0 0
    %2069 = vmatmul.mubr.bf16.gmra.mxu0 %v2031
    %v2070 = vpop.f32.mrf.mxu0
    %v2071 = vadd.f32 0.0, %v2070
    %v2072 = vpop.f32.mrf.mxu0
    %v2073 = vpop.f32.mrf.mxu0
    %v2074 = vadd.f32 0.0, %v2073
    %v2075 = vpop.f32.mrf.mxu0
    %2076 = vmatprep.mubr.bf16.mxu0 0
    %2077 = vmatmul.mubr.bf16.gmra.mxu0 %v2034
    %v2078 = vpop.f32.mrf.mxu0
    %v2079 = vadd.f32 0.0, %v2078
    %v2080 = vpop.f32.mrf.mxu0
    %v2081 = vpop.f32.mrf.mxu0
    %v2082 = vadd.f32 0.0, %v2081
    %v2083 = vpop.f32.mrf.mxu0
    %2084 = vdwg.mxu0
    %v2085 = vpack.c.bf16 %v2074, %v2071
    %v2086 = vpack.c.bf16 %v2082, %v2079
    %v2103 = vunpack.c.l.b16 %v2004
    %v2104 = vunpack.c.l.b16 %v2005
    %v2105 = vunpack.c.l.b16 %v2006
    %v2106 = vunpack.c.l.b16 %v2007
    %v2107 = vunpack.c.l.b16 %v2008
    %v2108 = vunpack.c.l.b16 %v2009
    %v2109 = vunpack.c.l.b16 %v2010
    %v2110 = vunpack.c.l.b16 %v2011
    %v2111 = vunpack.c.l.b16 %v2012
    %v2112 = vunpack.c.l.b16 %v2013
    %v2113 = vunpack.c.l.b16 %v2014
    %v2114 = vunpack.c.l.b16 %v2015
    %v2115 = vunpack.c.l.b16 %v2016
    %v2116 = vunpack.c.l.b16 %v2017
    %v2117 = vunpack.c.l.b16 %v2018
    %v2118 = vunpack.c.l.b16 %v2019
    %v2119 = vpack.c.b16 %v2104, %v2103
    %v2120 = vpack.c.b16 %v2106, %v2105
    %v2121 = vpack.c.b16 %v2108, %v2107
    %v2122 = vpack.c.b16 %v2110, %v2109
    %v2123 = vpack.c.b16 %v2112, %v2111
    %v2124 = vpack.c.b16 %v2114, %v2113
    %v2125 = vpack.c.b16 %v2116, %v2115
    %v2126 = vpack.c.b16 %v2118, %v2117
    %2135 = vmatprep.subr.bf16.mxu0 0
    %2136 = vmatpush1.bf16.msra.mxu0 %v2126
    %2137 = vmatprep.subr.bf16.mxu0 0
    %2138 = vmatpush1.bf16.msra.mxu0 %v2125
    %2139 = vmatprep.subr.bf16.mxu0 0
    %2140 = vmatpush1.bf16.msra.mxu0 %v2124
    %2141 = vmatprep.subr.bf16.mxu0 0
    %2142 = vmatpush1.bf16.msra.mxu0 %v2123
    %2143 = vmatprep.subr.bf16.mxu0 0
    %2144 = vmatpush1.bf16.msra.mxu0 %v2122
    %2145 = vmatprep.subr.bf16.mxu0 0
    %2146 = vmatpush1.bf16.msra.mxu0 %v2121
    %2147 = vmatprep.subr.bf16.mxu0 0
    %2148 = vmatpush1.bf16.msra.mxu0 %v2120
    %2149 = vmatprep.subr.bf16.mxu0 0
    %2150 = vmatpush1.bf16.msra.mxu0 %v2119
    %2151 = vmatprep.subr.bf16.mxu0 0
    %2152 = vmatpush2.bf16.msra.mxu0 0
    %2153 = vmatprep.subr.bf16.mxu0 0
    %2154 = vmatpush2.bf16.msra.mxu0 0
    %2155 = vmatprep.subr.bf16.mxu0 0
    %2156 = vmatpush2.bf16.msra.mxu0 0
    %2157 = vmatprep.subr.bf16.mxu0 0
    %2158 = vmatpush2.bf16.msra.mxu0 0
    %2159 = vmatprep.subr.bf16.mxu0 0
    %2160 = vmatpush2.bf16.msra.mxu0 0
    %2161 = vmatprep.subr.bf16.mxu0 0
    %2162 = vmatpush2.bf16.msra.mxu0 0
    %2163 = vmatprep.subr.bf16.mxu0 0
    %2164 = vmatpush2.bf16.msra.mxu0 0
    %2165 = vmatprep.subr.bf16.mxu0 0
    %2166 = vmatpush2.bf16.msra.mxu0 0
    %2167 = vmatprep.mubr.bf16.mxu0 0
    %2168 = vmatmul.mubr.bf16.gmra.mxu0 %v2085
    %v2169 = vpop.f32.mrf.mxu0
    %v2170 = vadd.f32 0.0, %v2169
    %v2171 = vpop.f32.mrf.mxu0
    %v2172 = vpop.f32.mrf.mxu0
    %v2173 = vadd.f32 0.0, %v2172
    %v2174 = vpop.f32.mrf.mxu0
    %2175 = vmatprep.mubr.bf16.mxu0 0
    %2176 = vmatmul.mubr.bf16.gmra.mxu0 %v2086
    %v2177 = vpop.f32.mrf.mxu0
    %v2178 = vadd.f32 0.0, %v2177
    %v2179 = vpop.f32.mrf.mxu0
    %v2180 = vpop.f32.mrf.mxu0
    %v2181 = vadd.f32 0.0, %v2180
    %v2182 = vpop.f32.mrf.mxu0
    %2183 = vdwg.mxu0
    %v2184 = vadd.f32 %v1986, %v2170
    %v2185 = vadd.f32 %v1989, %v2173
    %v2186 = vadd.f32 %v1994, %v2178
    %v2187 = vadd.f32 %v1997, %v2181
    %v2188 = vld [vmem:[%s14] sm:$0x1]
    %v2190 = vlaneseq
    %v2191 = vshrl.u32 %v2190, 7
    %v2192 = vsub.s32 0, %v2191
    %v2193 = vrot.slane %v2188, %v2192
    %v2195 = vadd.f32 %v2184, %v2193
    %v2196 = vadd.f32 %v2185, %v2193
    %v2197 = vadd.f32 %v2186, %v2193
    %v2198 = vadd.f32 %v2187, %v2193
    %v2199 = vxor.u32 %v2195, 2147483648
    %v2200 = vxor.u32 %v2196, 2147483648
    %v2201 = vxor.u32 %v2197, 2147483648
    %v2202 = vxor.u32 %v2198, 2147483648
    %v2203 = vmul.f32 %v2199, 1.442695
    %v2204 = vpow.pop %v2203
    %v2205 = vmul.f32 %v2200, 1.442695
    %v2206 = vpow.pop %v2205
    %v2207 = vmul.f32 %v2201, 1.442695
    %v2208 = vpow.pop %v2207
    %v2209 = vmul.f32 %v2202, 1.442695
    %v2210 = vpow.pop %v2209
    %v2211 = vadd.f32 %v2204, 1.0
    %v2212 = vadd.f32 %v2206, 1.0
    %v2213 = vadd.f32 %v2208, 1.0
    %v2214 = vadd.f32 %v2210, 1.0
    %v2215 = vrcp.pop %v2211
    %v2216 = vmul.f32 1.0, %v2215
    %v2217 = vrcp.pop %v2212
    %v2218 = vmul.f32 1.0, %v2217
    %v2219 = vrcp.pop %v2213
    %v2220 = vmul.f32 1.0, %v2219
    %v2221 = vrcp.pop %v2214
    %v2222 = vmul.f32 1.0, %v2221
    %2223 = vst.msk [vmem:[%s16] sm:$0xff] %vm210, %v2216
    %2224 = vst.msk [vmem:[%s16 + $0x8] sm:$0xff] %vm210, %v2218
    %2225 = vst.msk [vmem:[%s16 + $0x10] sm:$0xff] %vm210, %v2220
    %2226 = vst.msk [vmem:[%s16 + $0x18] sm:$0xff] %vm210, %v2222
    %v2227 = vld [vmem:[%s15] sm:$0xf]
    %v2228 = vlaneseq
    %v2229 = vshrl.u32 %v2228, 7
    %v2230 = vsub.s32 0, %v2229
    %v2231 = vrot.slane %v2227, %v2230
    %v2232 = vsub.f32 %v972, %v2231
    %v2233 = vmul.f32 %v2232, %v2232
    %vm2234 = vcmask 254976
    %v2235 = vsel %vm2234, %v2233, 0.0
    %2236 = vadd.xlane.f32.xlu0 %v2235
    %v2237 = vpop.xlane.xlu0 %2236
    %v2238 = vadd.f32 %v2237, 1.0
    %v2239 = vrcp.pop %v2238
    %v2240 = vmul.f32 1.0, %v2239
    %vm2241 = vcmask 1024
    %2242 = vst.msk [vmem:[#allocation5] sm:$0x3] %vm2241, %v2240
    %v2243 = vlaneseq
    %v2244 = vshrl.u32 %v2243, 7
    %v2245 = vsub.s32 1, %v2244
    %v2246 = vrot.slane %v2227, %v2245
    %v2247 = vsub.f32 %v972, %v2246
    %v2248 = vmul.f32 %v2247, %v2247
    %v2249 = vsel %vm2234, %v2248, 0.0
    %2250 = vadd.xlane.f32.xlu0 %v2249
    %v2251 = vpop.xlane.xlu0 %2250
    %v2252 = vadd.f32 %v2251, 1.0
    %v2253 = vrcp.pop %v2252
    %v2254 = vmul.f32 1.0, %v2253
    %vm2255 = vcmask 9224
    %2256 = vst.msk [vmem:[#allocation5] sm:$0x3] %vm2255, %v2254
    %v2257 = vlaneseq
    %v2258 = vshrl.u32 %v2257, 7
    %v2259 = vsub.s32 2, %v2258
    %v2260 = vrot.slane %v2227, %v2259
    %v2261 = vsub.f32 %v972, %v2260
    %v2262 = vmul.f32 %v2261, %v2261
    %v2263 = vsel %vm2234, %v2262, 0.0
    %2264 = vadd.xlane.f32.xlu0 %v2263
    %v2265 = vpop.xlane.xlu0 %2264
    %v2266 = vadd.f32 %v2265, 1.0
    %v2267 = vrcp.pop %v2266
    %v2268 = vmul.f32 1.0, %v2267
    %vm2269 = vcmask 17424
    %2270 = vst.msk [vmem:[#allocation5] sm:$0x3] %vm2269, %v2268
    %v2271 = vlaneseq
    %v2272 = vshrl.u32 %v2271, 7
    %v2273 = vsub.s32 3, %v2272
    %v2274 = vrot.slane %v2227, %v2273
    %v2275 = vsub.f32 %v972, %v2274
    %v2276 = vmul.f32 %v2275, %v2275
    %v2277 = vsel %vm2234, %v2276, 0.0
    %2278 = vadd.xlane.f32.xlu0 %v2277
    %v2279 = vpop.xlane.xlu0 %2278
    %v2280 = vadd.f32 %v2279, 1.0
    %v2281 = vrcp.pop %v2280
    %v2282 = vmul.f32 1.0, %v2281
    %vm2283 = vcmask 25624
    %2284 = vst.msk [vmem:[#allocation5] sm:$0x3] %vm2283, %v2282
    %v2285 = vld [vmem:[#allocation5] sm:$0x3]
    %vm2286 = vcmask 25600
    %v2287 = vsel %vm2286, %v2285, 0.0
    %2288 = vadd.xlane.f32.xlu0 %v2287
    %v2289 = vpop.xlane.xlu0 %2288
    %v2290 = vrcp.pop %v2289
    %v2291 = vmul.f32 %v2285, %v2290
    %2292 = vst.msk [vmem:[#allocation5] sm:$0x3] %vm2286, %v2291
    // Predicated region
    $region66: #{csa_rp_forward.1} parent=1 // pred_check
      _
    $region67: #{csa_rp_forward.1} parent=1 // pred_check_branch
      %2294 = sbr.rel (0) target = $region69
    $region68: #{csa_rp_forward.1} parent=1 // pred_region
      _
    $region69: #{csa_rp_forward.1} parent=1 // pred_fallthru
      _
    // Predicated region
    $region70: #{csa_rp_forward.1} parent=1 // pred_check
      _
    $region71: #{csa_rp_forward.1} parent=1 // pred_check_branch
      %2296 = sbr.rel (0) target = $region73
    $region72: #{csa_rp_forward.1} parent=1 // pred_region
      %s2298 = ssub.s32 32, 32
      %2299 = vsyncadd [#allocation4], %s2298
      %s2301 = sshll.u32 [#allocation3], 4
      %s2302 = int_to_ptr.vmem [resolvable:$true] %s2301
      %2304 = dma.vmem_to_hbm [thread:$0]  %s2302, 32, %s17, [#allocation4]
    $region73: #{csa_rp_forward.1} parent=1 // pred_fallthru
      _
    // Predicated region
    $region74: #{csa_rp_forward.1} parent=1 // pred_check
      _
    $region75: #{csa_rp_forward.1} parent=1 // pred_check_branch
      %2306 = sbr.rel (0) target = $region77
    $region76: #{csa_rp_forward.1} parent=1 // pred_region
      %s2308 = ssub.s32 32, 32
      %2309 = vsyncadd [#allocation6], %s2308
      %s2311 = sshll.u32 [#allocation5], 4
      %s2312 = int_to_ptr.vmem [resolvable:$true] %s2311
      %2314 = dma.vmem_to_hbm [thread:$0]  %s2312, 32, %s18, [#allocation6]
    $region77: #{csa_rp_forward.1} parent=1 // pred_fallthru
      _
    // Predicated region
    $region78: #{csa_rp_forward.1} parent=1 // pred_check
      _
    $region79: #{csa_rp_forward.1} parent=1 // pred_check_branch
      %2316 = sbr.rel (0) target = $region81
    $region80: #{csa_rp_forward.1} parent=1 // pred_region
      _
    $region81: #{csa_rp_forward.1} parent=1 // pred_fallthru
      _
    // Predicated region
    $region82: #{csa_rp_forward.1} parent=1 // pred_check
      _
    $region83: #{csa_rp_forward.1} parent=1 // pred_check_branch
      %2318 = sbr.rel (0) target = $region85
    $region84: #{csa_rp_forward.1} parent=1 // pred_region
      %2319 = dma.done [#allocation4], 32
    $region85: #{csa_rp_forward.1} parent=1 // pred_fallthru
      _
    // Predicated region
    $region86: #{csa_rp_forward.1} parent=1 // pred_check
      _
    $region87: #{csa_rp_forward.1} parent=1 // pred_check_branch
      %2321 = sbr.rel (0) target = $region89
    $region88: #{csa_rp_forward.1} parent=1 // pred_region
      %2322 = dma.done [#allocation6], 32
    $region89: #{csa_rp_forward.1} parent=1 // pred_fallthru
      _
    %2323 = vsyncpa [#allocation4], 1
    %2324 = vsyncpa [#allocation6], 1

</llo_original>
